<compile_context>
chip_gen: v7x
topology: tpu7x:2x2x1
jax: 0.10.0
libtpu: 0.0.40
codegen_flags: <defaults>
</compile_context>

<pallas_src>
import jax
import jax.numpy as jnp
from jax import lax
from jax.experimental import pallas as pl
from jax.experimental.pallas import tpu as pltpu

INPUT_SIZE = 1
HIDDEN = 100          # nn.LSTM(input_size=1, hidden_size=100)
OUTPUT_SIZE = 1
H_PAD = 128           # pad hidden dim to lane width; padded lanes stay exactly 0
UNROLL_LIMIT = 64     # fully unroll the recurrence when L <= this

# Gate packing order inside the kernel: (i, f, o, g).
# PyTorch packs rows as (i, f, g, o), so we pick gates in this order.
_GATE_ORDER = (0, 1, 3, 2)


# ------------------------------------------------------------------ kernel ---
def lstm_kernel(pre_ref, whh_ref, wlin_ref, blin_ref, out_ref):
    """Full LSTM recurrence + final Linear on the last hidden state.

    pre_ref : (L, 4*H_PAD)     f32  precomputed x_t * w_ih + b, gate order (i,f,o,g)
    whh_ref : (H_PAD, 4*H_PAD) bf16 hidden->gates weights, same gate order
    wlin_ref: (1, H_PAD)       f32  final Linear weight row (padded)
    blin_ref: (1, 1)           f32  final Linear bias
    out_ref : (1, 1)           f32  prediction for the last timestep
    """
    L = pre_ref.shape[0]

    whh = whh_ref[...]                                   # (H_PAD, 4*H_PAD) bf16
    h0 = jnp.zeros((1, H_PAD), jnp.float32)
    c0 = jnp.zeros((1, H_PAD), jnp.float32)

    def step(h, c, pre_t):
        gates = (jnp.dot(h.astype(jnp.bfloat16), whh,
                         preferred_element_type=jnp.float32)
                 + pre_t)                                # (1, 4*H_PAD) f32
        # one sigmoid over the contiguous (i, f, o) slab, one tanh for g
        ifo = jax.nn.sigmoid(gates[:, 0:3 * H_PAD])
        g = jnp.tanh(gates[:, 3 * H_PAD:4 * H_PAD])
        i = ifo[:, 0 * H_PAD:1 * H_PAD]
        f = ifo[:, 1 * H_PAD:2 * H_PAD]
        o = ifo[:, 2 * H_PAD:3 * H_PAD]
        c = f * c + i * g
        h = o * jnp.tanh(c)
        return h, c

    if L <= UNROLL_LIMIT:
        # Fully unrolled: static slices, maximal LLO scheduling freedom.
        h, c = h0, c0
        for t in range(L):
            h, c = step(h, c, pre_ref[pl.ds(t, 1), :])
    else:
        # Bounded code size for long sequences: dynamic row slice per step.
        def body(t, carry):
            h, c = carry
            return step(h, c, pre_ref[pl.ds(t, 1), :])
        h, c = lax.fori_loop(0, L, body, (h0, c0))

    # final Linear as VPU multiply + lane reduction (avoids a (128,1) MXU matmul)
    out_ref[...] = (jnp.sum(h * wlin_ref[...], axis=1, keepdims=True)
                    + blin_ref[...])


# ----------------------------------------------------------------- packing ---
def pack_params(params):
    """Pack PyTorch-layout LSTM/Linear params into the padded kernel layout.

    Call ONCE (outside the per-step path); only the sequence changes per call.
    Returns (wih_row f32, whh bf16, b_row f32, wlin_row f32, blin f32).
    """
    w_ih, w_hh, b_ih, b_hh, w_lin, b_lin = params
    H = HIDDEN

    wih_cols, whh_cols, b_cols = [], [], []
    for gi in _GATE_ORDER:                               # -> (i, f, o, g)
        # input->gate: (H, 1) -> row (1, H) -> pad to (1, H_PAD)
        wih_g = w_ih[gi * H:(gi + 1) * H, :].T
        wih_cols.append(jnp.pad(wih_g, ((0, 0), (0, H_PAD - H))))
        # hidden->gate: (H, H) -> transpose so gates = h @ W^T -> pad
        whh_g = w_hh[gi * H:(gi + 1) * H, :].T
        whh_cols.append(jnp.pad(whh_g, ((0, H_PAD - H), (0, H_PAD - H))))
        # bias: b_ih + b_hh
        b_g = (b_ih[gi * H:(gi + 1) * H] + b_hh[gi * H:(gi + 1) * H])[None, :]
        b_cols.append(jnp.pad(b_g, ((0, 0), (0, H_PAD - H))))

    wih_row = jnp.concatenate(wih_cols, axis=1)                          # (1, 4*H_PAD) f32
    whh_c = jnp.concatenate(whh_cols, axis=1).astype(jnp.bfloat16)       # (H_PAD, 4*H_PAD) bf16
    b_row = jnp.concatenate(b_cols, axis=1)                              # (1, 4*H_PAD) f32
    wlin_row = jnp.pad(w_lin, ((0, 0), (0, H_PAD - H)))                  # (1, H_PAD) f32
    blin = b_lin.reshape(1, 1)                                           # (1, 1) f32
    return wih_row, whh_c, b_row, wlin_row, blin


# ----------------------------------------------------------------- wrapper ---
@jax.jit
def lstm_forward_packed(seq, wih_row, whh_bf16, b_row, wlin_row, blin):
    """Forward with pre-packed params. seq: (L,) f32 -> (1,) like pred[-1]."""
    L = seq.shape[0]
    # Precompute the input+bias contribution for every timestep (input_size==1,
    # so x @ w_ih is just a broadcasted multiply).  (L, 4*H_PAD) f32.
    pre = seq.reshape(L, 1).astype(jnp.float32) * wih_row + b_row

    vmem = pl.BlockSpec(memory_space=pltpu.MemorySpace.VMEM)
    out = pl.pallas_call(
        lstm_kernel,
        out_shape=jax.ShapeDtypeStruct((1, 1), jnp.float32),
        in_specs=[vmem] * 4,
        out_specs=vmem,
    )(pre, whh_bf16, wlin_row, blin)
    return out.reshape(1)


def lstm_network_forward(seq, params):
    """Convenience wrapper (packs every call — prefer packing once + calling
    lstm_forward_packed directly in a loop)."""
    # TODO(synk): the PyTorch module carries self.hidden across calls; here each
    # call starts from (h0, c0) = 0, matching a freshly-initialized module.
    return lstm_forward_packed(seq, *pack_params(params))


# --------------------------------------------------------------- reference ---
def lstm_network_reference(seq, params):
    """Pure-JAX f32 reference of the PyTorch forward pass (unpadded)."""
    w_ih, w_hh, b_ih, b_hh, w_lin, b_lin = params
    H = HIDDEN
    x = seq.reshape(-1, 1).astype(jnp.float32)

    def step(carry, xt):
        h, c = carry
        gates = xt @ w_ih.T + h @ w_hh.T + b_ih + b_hh            # (1, 4H)
        i = jax.nn.sigmoid(gates[:, 0 * H:1 * H])
        f = jax.nn.sigmoid(gates[:, 1 * H:2 * H])
        g = jnp.tanh(gates[:, 2 * H:3 * H])
        o = jax.nn.sigmoid(gates[:, 3 * H:4 * H])
        c = f * c + i * g
        h = o * jnp.tanh(c)
        return (h, c), h

    h0 = jnp.zeros((1, H), jnp.float32)
    c0 = jnp.zeros((1, H), jnp.float32)
    (_, _), hs = lax.scan(step, (h0, c0), x[:, None, :])
    preds = hs[:, 0, :] @ w_lin.T + b_lin                          # (L, 1)
    return preds[-1]                                               # (1,)


# -------------------------------------------------------------------- main ---
def init_params(key):
    """Deterministic init matching PyTorch shapes; uniform(-k, k), k=1/sqrt(H)."""
    k = 1.0 / jnp.sqrt(jnp.float32(HIDDEN))
    keys = jax.random.split(key, 6)
    u = lambda kk, shape: jax.random.uniform(kk, shape, jnp.float32, -k, k)
    w_ih = u(keys[0], (4 * HIDDEN, INPUT_SIZE))    # lstm.weight_ih_l0
    w_hh = u(keys[1], (4 * HIDDEN, HIDDEN))        # lstm.weight_hh_l0
    b_ih = u(keys[2], (4 * HIDDEN,))               # lstm.bias_ih_l0
    b_hh = u(keys[3], (4 * HIDDEN,))               # lstm.bias_hh_l0
    w_lin = u(keys[4], (OUTPUT_SIZE, HIDDEN))      # linear.weight
    b_lin = u(keys[5], (OUTPUT_SIZE,))             # linear.bias
    return (w_ih, w_hh, b_ih, b_hh, w_lin, b_lin)


if __name__ == "__main__":
    key = jax.random.PRNGKey(0)
    pkey, xkey = jax.random.split(key)
    params = init_params(pkey)

    L = 12                                          # small input window
    seq = jax.random.normal(xkey, (L,), jnp.float32)

    # Pack parameters ONCE (hoisted out of the per-call path), then run.
    packed = tuple(jax.block_until_ready(p) for p in pack_params(params))
    pred = jax.block_until_ready(lstm_forward_packed(seq, *packed))
    ref = jax.block_until_ready(lstm_network_reference(seq, params))

    assert pred.shape == (1,), pred.shape
    # W_hh is bf16 in the kernel (f32 accumulation) -> loosen tolerance vs the
    # pure-f32 reference.
    assert jnp.allclose(pred, ref, atol=3e-2, rtol=3e-2), (pred, ref)
    print("KERNEL_OK")
</pallas_src>

<mosaic_0001>
module attributes {stable_mosaic.version = 11 : i64} {
  func.func @lstm_kernel(%arg0: memref<12x512xf32, #tpu.memory_space<vmem>>, %arg1: memref<128x512xbf16, #tpu.memory_space<vmem>>, %arg2: memref<1x128xf32, #tpu.memory_space<vmem>>, %arg3: memref<1x1xf32, #tpu.memory_space<vmem>>, %arg4: memref<1x1xf32, #tpu.memory_space<vmem>>) attributes {dimension_semantics = [], scalar_prefetch = 0 : i64, scratch_operands = 0 : i64, tpu.core_type = #tpu.core_type<tc>} {
    %c0 = arith.constant 0 : index
    %c0_0 = arith.constant 0 : index
    %0 = vector.load %arg1[%c0, %c0_0] : memref<128x512xbf16, #tpu.memory_space<vmem>>, vector<128x512xbf16>
    %cst = arith.constant 0.000000e+00 : f32
    %1 = vector.broadcast %cst : f32 to vector<1x128xf32>
    %cst_1 = arith.constant 0.000000e+00 : f32
    %2 = vector.broadcast %cst_1 : f32 to vector<1x128xf32>
    %c0_2 = arith.constant 0 : index
    %c0_3 = arith.constant 0 : index
    %3 = vector.load %arg0[%c0_2, %c0_3] : memref<12x512xf32, #tpu.memory_space<vmem>>, vector<1x512xf32>
    %4 = arith.truncf %1 : vector<1x128xf32> to vector<1x128xbf16>
    %cst_4 = arith.constant dense<0.000000e+00> : vector<1x512xf32>
    %5 = tpu.matmul %4, %0, %cst_4 {dimension_numbers = #tpu.dot_dimension_numbers<[1], [0], [0], [1], [0, 0, 1, 1], [], []>} : vector<1x128xbf16>, vector<128x512xbf16>, vector<1x512xf32> -> vector<1x512xf32>
    %6 = arith.addf %5, %3 : vector<1x512xf32>
    %7 = vector.extract_strided_slice %6 {offsets = [0, 0], sizes = [1, 384], strides = [1, 1]} : vector<1x512xf32> to vector<1x384xf32>
    %8 = arith.negf %7 : vector<1x384xf32>
    %9 = math.exp %8 : vector<1x384xf32>
    %cst_5 = arith.constant 1.000000e+00 : f32
    %10 = vector.broadcast %cst_5 : f32 to vector<1x384xf32>
    %11 = arith.addf %10, %9 : vector<1x384xf32>
    %12 = arith.divf %10, %11 : vector<1x384xf32>
    %13 = vector.extract_strided_slice %6 {offsets = [0, 384], sizes = [1, 128], strides = [1, 1]} : vector<1x512xf32> to vector<1x128xf32>
    %14 = math.tanh %13 : vector<1x128xf32>
    %15 = vector.extract_strided_slice %12 {offsets = [0, 0], sizes = [1, 128], strides = [1, 1]} : vector<1x384xf32> to vector<1x128xf32>
    %16 = vector.extract_strided_slice %12 {offsets = [0, 128], sizes = [1, 128], strides = [1, 1]} : vector<1x384xf32> to vector<1x128xf32>
    %17 = vector.extract_strided_slice %12 {offsets = [0, 256], sizes = [1, 128], strides = [1, 1]} : vector<1x384xf32> to vector<1x128xf32>
    %18 = arith.mulf %16, %2 : vector<1x128xf32>
    %19 = arith.mulf %15, %14 : vector<1x128xf32>
    %20 = arith.addf %18, %19 : vector<1x128xf32>
    %21 = math.tanh %20 : vector<1x128xf32>
    %22 = arith.mulf %17, %21 : vector<1x128xf32>
    %c1 = arith.constant 1 : index
    %c0_6 = arith.constant 0 : index
    %23 = vector.load %arg0[%c1, %c0_6] : memref<12x512xf32, #tpu.memory_space<vmem>>, vector<1x512xf32>
    %24 = arith.truncf %22 : vector<1x128xf32> to vector<1x128xbf16>
    %cst_7 = arith.constant dense<0.000000e+00> : vector<1x512xf32>
    %25 = tpu.matmul %24, %0, %cst_7 {dimension_numbers = #tpu.dot_dimension_numbers<[1], [0], [0], [1], [0, 0, 1, 1], [], []>} : vector<1x128xbf16>, vector<128x512xbf16>, vector<1x512xf32> -> vector<1x512xf32>
    %26 = arith.addf %25, %23 : vector<1x512xf32>
    %27 = vector.extract_strided_slice %26 {offsets = [0, 0], sizes = [1, 384], strides = [1, 1]} : vector<1x512xf32> to vector<1x384xf32>
    %28 = arith.negf %27 : vector<1x384xf32>
    %29 = math.exp %28 : vector<1x384xf32>
    %cst_8 = arith.constant 1.000000e+00 : f32
    %30 = vector.broadcast %cst_8 : f32 to vector<1x384xf32>
    %31 = arith.addf %30, %29 : vector<1x384xf32>
    %32 = arith.divf %30, %31 : vector<1x384xf32>
    %33 = vector.extract_strided_slice %26 {offsets = [0, 384], sizes = [1, 128], strides = [1, 1]} : vector<1x512xf32> to vector<1x128xf32>
    %34 = math.tanh %33 : vector<1x128xf32>
    %35 = vector.extract_strided_slice %32 {offsets = [0, 0], sizes = [1, 128], strides = [1, 1]} : vector<1x384xf32> to vector<1x128xf32>
    %36 = vector.extract_strided_slice %32 {offsets = [0, 128], sizes = [1, 128], strides = [1, 1]} : vector<1x384xf32> to vector<1x128xf32>
    %37 = vector.extract_strided_slice %32 {offsets = [0, 256], sizes = [1, 128], strides = [1, 1]} : vector<1x384xf32> to vector<1x128xf32>
    %38 = arith.mulf %36, %20 : vector<1x128xf32>
    %39 = arith.mulf %35, %34 : vector<1x128xf32>
    %40 = arith.addf %38, %39 : vector<1x128xf32>
    %41 = math.tanh %40 : vector<1x128xf32>
    %42 = arith.mulf %37, %41 : vector<1x128xf32>
    %c2 = arith.constant 2 : index
    %c0_9 = arith.constant 0 : index
    %43 = vector.load %arg0[%c2, %c0_9] : memref<12x512xf32, #tpu.memory_space<vmem>>, vector<1x512xf32>
    %44 = arith.truncf %42 : vector<1x128xf32> to vector<1x128xbf16>
    %cst_10 = arith.constant dense<0.000000e+00> : vector<1x512xf32>
    %45 = tpu.matmul %44, %0, %cst_10 {dimension_numbers = #tpu.dot_dimension_numbers<[1], [0], [0], [1], [0, 0, 1, 1], [], []>} : vector<1x128xbf16>, vector<128x512xbf16>, vector<1x512xf32> -> vector<1x512xf32>
    %46 = arith.addf %45, %43 : vector<1x512xf32>
    %47 = vector.extract_strided_slice %46 {offsets = [0, 0], sizes = [1, 384], strides = [1, 1]} : vector<1x512xf32> to vector<1x384xf32>
    %48 = arith.negf %47 : vector<1x384xf32>
    %49 = math.exp %48 : vector<1x384xf32>
    %cst_11 = arith.constant 1.000000e+00 : f32
    %50 = vector.broadcast %cst_11 : f32 to vector<1x384xf32>
    %51 = arith.addf %50, %49 : vector<1x384xf32>
    %52 = arith.divf %50, %51 : vector<1x384xf32>
    %53 = vector.extract_strided_slice %46 {offsets = [0, 384], sizes = [1, 128], strides = [1, 1]} : vector<1x512xf32> to vector<1x128xf32>
    %54 = math.tanh %53 : vector<1x128xf32>
    %55 = vector.extract_strided_slice %52 {offsets = [0, 0], sizes = [1, 128], strides = [1, 1]} : vector<1x384xf32> to vector<1x128xf32>
    %56 = vector.extract_strided_slice %52 {offsets = [0, 128], sizes = [1, 128], strides = [1, 1]} : vector<1x384xf32> to vector<1x128xf32>
    %57 = vector.extract_strided_slice %52 {offsets = [0, 256], sizes = [1, 128], strides = [1, 1]} : vector<1x384xf32> to vector<1x128xf32>
    %58 = arith.mulf %56, %40 : vector<1x128xf32>
    %59 = arith.mulf %55, %54 : vector<1x128xf32>
    %60 = arith.addf %58, %59 : vector<1x128xf32>
    %61 = math.tanh %60 : vector<1x128xf32>
    %62 = arith.mulf %57, %61 : vector<1x128xf32>
    %c3 = arith.constant 3 : index
    %c0_12 = arith.constant 0 : index
    %63 = vector.load %arg0[%c3, %c0_12] : memref<12x512xf32, #tpu.memory_space<vmem>>, vector<1x512xf32>
    %64 = arith.truncf %62 : vector<1x128xf32> to vector<1x128xbf16>
    %cst_13 = arith.constant dense<0.000000e+00> : vector<1x512xf32>
    %65 = tpu.matmul %64, %0, %cst_13 {dimension_numbers = #tpu.dot_dimension_numbers<[1], [0], [0], [1], [0, 0, 1, 1], [], []>} : vector<1x128xbf16>, vector<128x512xbf16>, vector<1x512xf32> -> vector<1x512xf32>
    %66 = arith.addf %65, %63 : vector<1x512xf32>
    %67 = vector.extract_strided_slice %66 {offsets = [0, 0], sizes = [1, 384], strides = [1, 1]} : vector<1x512xf32> to vector<1x384xf32>
    %68 = arith.negf %67 : vector<1x384xf32>
    %69 = math.exp %68 : vector<1x384xf32>
    %cst_14 = arith.constant 1.000000e+00 : f32
    %70 = vector.broadcast %cst_14 : f32 to vector<1x384xf32>
    %71 = arith.addf %70, %69 : vector<1x384xf32>
    %72 = arith.divf %70, %71 : vector<1x384xf32>
    %73 = vector.extract_strided_slice %66 {offsets = [0, 384], sizes = [1, 128], strides = [1, 1]} : vector<1x512xf32> to vector<1x128xf32>
    %74 = math.tanh %73 : vector<1x128xf32>
    %75 = vector.extract_strided_slice %72 {offsets = [0, 0], sizes = [1, 128], strides = [1, 1]} : vector<1x384xf32> to vector<1x128xf32>
    %76 = vector.extract_strided_slice %72 {offsets = [0, 128], sizes = [1, 128], strides = [1, 1]} : vector<1x384xf32> to vector<1x128xf32>
    %77 = vector.extract_strided_slice %72 {offsets = [0, 256], sizes = [1, 128], strides = [1, 1]} : vector<1x384xf32> to vector<1x128xf32>
    %78 = arith.mulf %76, %60 : vector<1x128xf32>
    %79 = arith.mulf %75, %74 : vector<1x128xf32>
    %80 = arith.addf %78, %79 : vector<1x128xf32>
    %81 = math.tanh %80 : vector<1x128xf32>
    %82 = arith.mulf %77, %81 : vector<1x128xf32>
    %c4 = arith.constant 4 : index
    %c0_15 = arith.constant 0 : index
    %83 = vector.load %arg0[%c4, %c0_15] : memref<12x512xf32, #tpu.memory_space<vmem>>, vector<1x512xf32>
    %84 = arith.truncf %82 : vector<1x128xf32> to vector<1x128xbf16>
    %cst_16 = arith.constant dense<0.000000e+00> : vector<1x512xf32>
    %85 = tpu.matmul %84, %0, %cst_16 {dimension_numbers = #tpu.dot_dimension_numbers<[1], [0], [0], [1], [0, 0, 1, 1], [], []>} : vector<1x128xbf16>, vector<128x512xbf16>, vector<1x512xf32> -> vector<1x512xf32>
    %86 = arith.addf %85, %83 : vector<1x512xf32>
    %87 = vector.extract_strided_slice %86 {offsets = [0, 0], sizes = [1, 384], strides = [1, 1]} : vector<1x512xf32> to vector<1x384xf32>
    %88 = arith.negf %87 : vector<1x384xf32>
    %89 = math.exp %88 : vector<1x384xf32>
    %cst_17 = arith.constant 1.000000e+00 : f32
    %90 = vector.broadcast %cst_17 : f32 to vector<1x384xf32>
    %91 = arith.addf %90, %89 : vector<1x384xf32>
    %92 = arith.divf %90, %91 : vector<1x384xf32>
    %93 = vector.extract_strided_slice %86 {offsets = [0, 384], sizes = [1, 128], strides = [1, 1]} : vector<1x512xf32> to vector<1x128xf32>
    %94 = math.tanh %93 : vector<1x128xf32>
    %95 = vector.extract_strided_slice %92 {offsets = [0, 0], sizes = [1, 128], strides = [1, 1]} : vector<1x384xf32> to vector<1x128xf32>
    %96 = vector.extract_strided_slice %92 {offsets = [0, 128], sizes = [1, 128], strides = [1, 1]} : vector<1x384xf32> to vector<1x128xf32>
    %97 = vector.extract_strided_slice %92 {offsets = [0, 256], sizes = [1, 128], strides = [1, 1]} : vector<1x384xf32> to vector<1x128xf32>
    %98 = arith.mulf %96, %80 : vector<1x128xf32>
    %99 = arith.mulf %95, %94 : vector<1x128xf32>
    %100 = arith.addf %98, %99 : vector<1x128xf32>
    %101 = math.tanh %100 : vector<1x128xf32>
    %102 = arith.mulf %97, %101 : vector<1x128xf32>
    %c5 = arith.constant 5 : index
    %c0_18 = arith.constant 0 : index
    %103 = vector.load %arg0[%c5, %c0_18] : memref<12x512xf32, #tpu.memory_space<vmem>>, vector<1x512xf32>
    %104 = arith.truncf %102 : vector<1x128xf32> to vector<1x128xbf16>
    %cst_19 = arith.constant dense<0.000000e+00> : vector<1x512xf32>
    %105 = tpu.matmul %104, %0, %cst_19 {dimension_numbers = #tpu.dot_dimension_numbers<[1], [0], [0], [1], [0, 0, 1, 1], [], []>} : vector<1x128xbf16>, vector<128x512xbf16>, vector<1x512xf32> -> vector<1x512xf32>
    %106 = arith.addf %105, %103 : vector<1x512xf32>
    %107 = vector.extract_strided_slice %106 {offsets = [0, 0], sizes = [1, 384], strides = [1, 1]} : vector<1x512xf32> to vector<1x384xf32>
    %108 = arith.negf %107 : vector<1x384xf32>
    %109 = math.exp %108 : vector<1x384xf32>
    %cst_20 = arith.constant 1.000000e+00 : f32
    %110 = vector.broadcast %cst_20 : f32 to vector<1x384xf32>
    %111 = arith.addf %110, %109 : vector<1x384xf32>
    %112 = arith.divf %110, %111 : vector<1x384xf32>
    %113 = vector.extract_strided_slice %106 {offsets = [0, 384], sizes = [1, 128], strides = [1, 1]} : vector<1x512xf32> to vector<1x128xf32>
    %114 = math.tanh %113 : vector<1x128xf32>
    %115 = vector.extract_strided_slice %112 {offsets = [0, 0], sizes = [1, 128], strides = [1, 1]} : vector<1x384xf32> to vector<1x128xf32>
    %116 = vector.extract_strided_slice %112 {offsets = [0, 128], sizes = [1, 128], strides = [1, 1]} : vector<1x384xf32> to vector<1x128xf32>
    %117 = vector.extract_strided_slice %112 {offsets = [0, 256], sizes = [1, 128], strides = [1, 1]} : vector<1x384xf32> to vector<1x128xf32>
    %118 = arith.mulf %116, %100 : vector<1x128xf32>
    %119 = arith.mulf %115, %114 : vector<1x128xf32>
    %120 = arith.addf %118, %119 : vector<1x128xf32>
    %121 = math.tanh %120 : vector<1x128xf32>
    %122 = arith.mulf %117, %121 : vector<1x128xf32>
    %c6 = arith.constant 6 : index
    %c0_21 = arith.constant 0 : index
    %123 = vector.load %arg0[%c6, %c0_21] : memref<12x512xf32, #tpu.memory_space<vmem>>, vector<1x512xf32>
    %124 = arith.truncf %122 : vector<1x128xf32> to vector<1x128xbf16>
    %cst_22 = arith.constant dense<0.000000e+00> : vector<1x512xf32>
    %125 = tpu.matmul %124, %0, %cst_22 {dimension_numbers = #tpu.dot_dimension_numbers<[1], [0], [0], [1], [0, 0, 1, 1], [], []>} : vector<1x128xbf16>, vector<128x512xbf16>, vector<1x512xf32> -> vector<1x512xf32>
    %126 = arith.addf %125, %123 : vector<1x512xf32>
    %127 = vector.extract_strided_slice %126 {offsets = [0, 0], sizes = [1, 384], strides = [1, 1]} : vector<1x512xf32> to vector<1x384xf32>
    %128 = arith.negf %127 : vector<1x384xf32>
    %129 = math.exp %128 : vector<1x384xf32>
    %cst_23 = arith.constant 1.000000e+00 : f32
    %130 = vector.broadcast %cst_23 : f32 to vector<1x384xf32>
    %131 = arith.addf %130, %129 : vector<1x384xf32>
    %132 = arith.divf %130, %131 : vector<1x384xf32>
    %133 = vector.extract_strided_slice %126 {offsets = [0, 384], sizes = [1, 128], strides = [1, 1]} : vector<1x512xf32> to vector<1x128xf32>
    %134 = math.tanh %133 : vector<1x128xf32>
    %135 = vector.extract_strided_slice %132 {offsets = [0, 0], sizes = [1, 128], strides = [1, 1]} : vector<1x384xf32> to vector<1x128xf32>
    %136 = vector.extract_strided_slice %132 {offsets = [0, 128], sizes = [1, 128], strides = [1, 1]} : vector<1x384xf32> to vector<1x128xf32>
    %137 = vector.extract_strided_slice %132 {offsets = [0, 256], sizes = [1, 128], strides = [1, 1]} : vector<1x384xf32> to vector<1x128xf32>
    %138 = arith.mulf %136, %120 : vector<1x128xf32>
    %139 = arith.mulf %135, %134 : vector<1x128xf32>
    %140 = arith.addf %138, %139 : vector<1x128xf32>
    %141 = math.tanh %140 : vector<1x128xf32>
    %142 = arith.mulf %137, %141 : vector<1x128xf32>
    %c7 = arith.constant 7 : index
    %c0_24 = arith.constant 0 : index
    %143 = vector.load %arg0[%c7, %c0_24] : memref<12x512xf32, #tpu.memory_space<vmem>>, vector<1x512xf32>
    %144 = arith.truncf %142 : vector<1x128xf32> to vector<1x128xbf16>
    %cst_25 = arith.constant dense<0.000000e+00> : vector<1x512xf32>
    %145 = tpu.matmul %144, %0, %cst_25 {dimension_numbers = #tpu.dot_dimension_numbers<[1], [0], [0], [1], [0, 0, 1, 1], [], []>} : vector<1x128xbf16>, vector<128x512xbf16>, vector<1x512xf32> -> vector<1x512xf32>
    %146 = arith.addf %145, %143 : vector<1x512xf32>
    %147 = vector.extract_strided_slice %146 {offsets = [0, 0], sizes = [1, 384], strides = [1, 1]} : vector<1x512xf32> to vector<1x384xf32>
    %148 = arith.negf %147 : vector<1x384xf32>
    %149 = math.exp %148 : vector<1x384xf32>
    %cst_26 = arith.constant 1.000000e+00 : f32
    %150 = vector.broadcast %cst_26 : f32 to vector<1x384xf32>
    %151 = arith.addf %150, %149 : vector<1x384xf32>
    %152 = arith.divf %150, %151 : vector<1x384xf32>
    %153 = vector.extract_strided_slice %146 {offsets = [0, 384], sizes = [1, 128], strides = [1, 1]} : vector<1x512xf32> to vector<1x128xf32>
    %154 = math.tanh %153 : vector<1x128xf32>
    %155 = vector.extract_strided_slice %152 {offsets = [0, 0], sizes = [1, 128], strides = [1, 1]} : vector<1x384xf32> to vector<1x128xf32>
    %156 = vector.extract_strided_slice %152 {offsets = [0, 128], sizes = [1, 128], strides = [1, 1]} : vector<1x384xf32> to vector<1x128xf32>
    %157 = vector.extract_strided_slice %152 {offsets = [0, 256], sizes = [1, 128], strides = [1, 1]} : vector<1x384xf32> to vector<1x128xf32>
    %158 = arith.mulf %156, %140 : vector<1x128xf32>
    %159 = arith.mulf %155, %154 : vector<1x128xf32>
    %160 = arith.addf %158, %159 : vector<1x128xf32>
    %161 = math.tanh %160 : vector<1x128xf32>
    %162 = arith.mulf %157, %161 : vector<1x128xf32>
    %c8 = arith.constant 8 : index
    %c0_27 = arith.constant 0 : index
    %163 = vector.load %arg0[%c8, %c0_27] : memref<12x512xf32, #tpu.memory_space<vmem>>, vector<1x512xf32>
    %164 = arith.truncf %162 : vector<1x128xf32> to vector<1x128xbf16>
    %cst_28 = arith.constant dense<0.000000e+00> : vector<1x512xf32>
    %165 = tpu.matmul %164, %0, %cst_28 {dimension_numbers = #tpu.dot_dimension_numbers<[1], [0], [0], [1], [0, 0, 1, 1], [], []>} : vector<1x128xbf16>, vector<128x512xbf16>, vector<1x512xf32> -> vector<1x512xf32>
    %166 = arith.addf %165, %163 : vector<1x512xf32>
    %167 = vector.extract_strided_slice %166 {offsets = [0, 0], sizes = [1, 384], strides = [1, 1]} : vector<1x512xf32> to vector<1x384xf32>
    %168 = arith.negf %167 : vector<1x384xf32>
    %169 = math.exp %168 : vector<1x384xf32>
    %cst_29 = arith.constant 1.000000e+00 : f32
    %170 = vector.broadcast %cst_29 : f32 to vector<1x384xf32>
    %171 = arith.addf %170, %169 : vector<1x384xf32>
    %172 = arith.divf %170, %171 : vector<1x384xf32>
    %173 = vector.extract_strided_slice %166 {offsets = [0, 384], sizes = [1, 128], strides = [1, 1]} : vector<1x512xf32> to vector<1x128xf32>
    %174 = math.tanh %173 : vector<1x128xf32>
    %175 = vector.extract_strided_slice %172 {offsets = [0, 0], sizes = [1, 128], strides = [1, 1]} : vector<1x384xf32> to vector<1x128xf32>
    %176 = vector.extract_strided_slice %172 {offsets = [0, 128], sizes = [1, 128], strides = [1, 1]} : vector<1x384xf32> to vector<1x128xf32>
    %177 = vector.extract_strided_slice %172 {offsets = [0, 256], sizes = [1, 128], strides = [1, 1]} : vector<1x384xf32> to vector<1x128xf32>
    %178 = arith.mulf %176, %160 : vector<1x128xf32>
    %179 = arith.mulf %175, %174 : vector<1x128xf32>
    %180 = arith.addf %178, %179 : vector<1x128xf32>
    %181 = math.tanh %180 : vector<1x128xf32>
    %182 = arith.mulf %177, %181 : vector<1x128xf32>
    %c9 = arith.constant 9 : index
    %c0_30 = arith.constant 0 : index
    %183 = vector.load %arg0[%c9, %c0_30] : memref<12x512xf32, #tpu.memory_space<vmem>>, vector<1x512xf32>
    %184 = arith.truncf %182 : vector<1x128xf32> to vector<1x128xbf16>
    %cst_31 = arith.constant dense<0.000000e+00> : vector<1x512xf32>
    %185 = tpu.matmul %184, %0, %cst_31 {dimension_numbers = #tpu.dot_dimension_numbers<[1], [0], [0], [1], [0, 0, 1, 1], [], []>} : vector<1x128xbf16>, vector<128x512xbf16>, vector<1x512xf32> -> vector<1x512xf32>
    %186 = arith.addf %185, %183 : vector<1x512xf32>
    %187 = vector.extract_strided_slice %186 {offsets = [0, 0], sizes = [1, 384], strides = [1, 1]} : vector<1x512xf32> to vector<1x384xf32>
    %188 = arith.negf %187 : vector<1x384xf32>
    %189 = math.exp %188 : vector<1x384xf32>
    %cst_32 = arith.constant 1.000000e+00 : f32
    %190 = vector.broadcast %cst_32 : f32 to vector<1x384xf32>
    %191 = arith.addf %190, %189 : vector<1x384xf32>
    %192 = arith.divf %190, %191 : vector<1x384xf32>
    %193 = vector.extract_strided_slice %186 {offsets = [0, 384], sizes = [1, 128], strides = [1, 1]} : vector<1x512xf32> to vector<1x128xf32>
    %194 = math.tanh %193 : vector<1x128xf32>
    %195 = vector.extract_strided_slice %192 {offsets = [0, 0], sizes = [1, 128], strides = [1, 1]} : vector<1x384xf32> to vector<1x128xf32>
    %196 = vector.extract_strided_slice %192 {offsets = [0, 128], sizes = [1, 128], strides = [1, 1]} : vector<1x384xf32> to vector<1x128xf32>
    %197 = vector.extract_strided_slice %192 {offsets = [0, 256], sizes = [1, 128], strides = [1, 1]} : vector<1x384xf32> to vector<1x128xf32>
    %198 = arith.mulf %196, %180 : vector<1x128xf32>
    %199 = arith.mulf %195, %194 : vector<1x128xf32>
    %200 = arith.addf %198, %199 : vector<1x128xf32>
    %201 = math.tanh %200 : vector<1x128xf32>
    %202 = arith.mulf %197, %201 : vector<1x128xf32>
    %c10 = arith.constant 10 : index
    %c0_33 = arith.constant 0 : index
    %203 = vector.load %arg0[%c10, %c0_33] : memref<12x512xf32, #tpu.memory_space<vmem>>, vector<1x512xf32>
    %204 = arith.truncf %202 : vector<1x128xf32> to vector<1x128xbf16>
    %cst_34 = arith.constant dense<0.000000e+00> : vector<1x512xf32>
    %205 = tpu.matmul %204, %0, %cst_34 {dimension_numbers = #tpu.dot_dimension_numbers<[1], [0], [0], [1], [0, 0, 1, 1], [], []>} : vector<1x128xbf16>, vector<128x512xbf16>, vector<1x512xf32> -> vector<1x512xf32>
    %206 = arith.addf %205, %203 : vector<1x512xf32>
    %207 = vector.extract_strided_slice %206 {offsets = [0, 0], sizes = [1, 384], strides = [1, 1]} : vector<1x512xf32> to vector<1x384xf32>
    %208 = arith.negf %207 : vector<1x384xf32>
    %209 = math.exp %208 : vector<1x384xf32>
    %cst_35 = arith.constant 1.000000e+00 : f32
    %210 = vector.broadcast %cst_35 : f32 to vector<1x384xf32>
    %211 = arith.addf %210, %209 : vector<1x384xf32>
    %212 = arith.divf %210, %211 : vector<1x384xf32>
    %213 = vector.extract_strided_slice %206 {offsets = [0, 384], sizes = [1, 128], strides = [1, 1]} : vector<1x512xf32> to vector<1x128xf32>
    %214 = math.tanh %213 : vector<1x128xf32>
    %215 = vector.extract_strided_slice %212 {offsets = [0, 0], sizes = [1, 128], strides = [1, 1]} : vector<1x384xf32> to vector<1x128xf32>
    %216 = vector.extract_strided_slice %212 {offsets = [0, 128], sizes = [1, 128], strides = [1, 1]} : vector<1x384xf32> to vector<1x128xf32>
    %217 = vector.extract_strided_slice %212 {offsets = [0, 256], sizes = [1, 128], strides = [1, 1]} : vector<1x384xf32> to vector<1x128xf32>
    %218 = arith.mulf %216, %200 : vector<1x128xf32>
    %219 = arith.mulf %215, %214 : vector<1x128xf32>
    %220 = arith.addf %218, %219 : vector<1x128xf32>
    %221 = math.tanh %220 : vector<1x128xf32>
    %222 = arith.mulf %217, %221 : vector<1x128xf32>
    %c11 = arith.constant 11 : index
    %c0_36 = arith.constant 0 : index
    %223 = vector.load %arg0[%c11, %c0_36] : memref<12x512xf32, #tpu.memory_space<vmem>>, vector<1x512xf32>
    %224 = arith.truncf %222 : vector<1x128xf32> to vector<1x128xbf16>
    %cst_37 = arith.constant dense<0.000000e+00> : vector<1x512xf32>
    %225 = tpu.matmul %224, %0, %cst_37 {dimension_numbers = #tpu.dot_dimension_numbers<[1], [0], [0], [1], [0, 0, 1, 1], [], []>} : vector<1x128xbf16>, vector<128x512xbf16>, vector<1x512xf32> -> vector<1x512xf32>
    %226 = arith.addf %225, %223 : vector<1x512xf32>
    %227 = vector.extract_strided_slice %226 {offsets = [0, 0], sizes = [1, 384], strides = [1, 1]} : vector<1x512xf32> to vector<1x384xf32>
    %228 = arith.negf %227 : vector<1x384xf32>
    %229 = math.exp %228 : vector<1x384xf32>
    %cst_38 = arith.constant 1.000000e+00 : f32
    %230 = vector.broadcast %cst_38 : f32 to vector<1x384xf32>
    %231 = arith.addf %230, %229 : vector<1x384xf32>
    %232 = arith.divf %230, %231 : vector<1x384xf32>
    %233 = vector.extract_strided_slice %226 {offsets = [0, 384], sizes = [1, 128], strides = [1, 1]} : vector<1x512xf32> to vector<1x128xf32>
    %234 = math.tanh %233 : vector<1x128xf32>
    %235 = vector.extract_strided_slice %232 {offsets = [0, 0], sizes = [1, 128], strides = [1, 1]} : vector<1x384xf32> to vector<1x128xf32>
    %236 = vector.extract_strided_slice %232 {offsets = [0, 128], sizes = [1, 128], strides = [1, 1]} : vector<1x384xf32> to vector<1x128xf32>
    %237 = vector.extract_strided_slice %232 {offsets = [0, 256], sizes = [1, 128], strides = [1, 1]} : vector<1x384xf32> to vector<1x128xf32>
    %238 = arith.mulf %236, %220 : vector<1x128xf32>
    %239 = arith.mulf %235, %234 : vector<1x128xf32>
    %240 = arith.addf %238, %239 : vector<1x128xf32>
    %241 = math.tanh %240 : vector<1x128xf32>
    %242 = arith.mulf %237, %241 : vector<1x128xf32>
    %c0_39 = arith.constant 0 : index
    %c0_40 = arith.constant 0 : index
    %243 = vector.load %arg2[%c0_39, %c0_40] : memref<1x128xf32, #tpu.memory_space<vmem>>, vector<1x128xf32>
    %244 = arith.mulf %242, %243 : vector<1x128xf32>
    %cst_41 = arith.constant dense<0.000000e+00> : vector<1xf32>
    %245 = vector.multi_reduction <add>, %244, %cst_41 [1] : vector<1x128xf32> to vector<1xf32>
    %246 = vector.shape_cast %245 : vector<1xf32> to vector<1x1xf32>
    %c0_42 = arith.constant 0 : index
    %c0_43 = arith.constant 0 : index
    %247 = vector.load %arg3[%c0_42, %c0_43] : memref<1x1xf32, #tpu.memory_space<vmem>>, vector<1x1xf32>
    %248 = arith.addf %246, %247 : vector<1x1xf32>
    %c0_44 = arith.constant 0 : index
    %c0_45 = arith.constant 0 : index
    %249 = vector.load %arg4[%c0_44, %c0_45] : memref<1x1xf32, #tpu.memory_space<vmem>>, vector<1x1xf32>
    tpu.vector_store %arg4[%c0_44, %c0_45], %248 {strides = array<i32>} : memref<1x1xf32, #tpu.memory_space<vmem>>, vector<1x1xf32>,
    return
  }
}

</mosaic_0001>

<llo_original>
// kernel: lstm_forward_packed.1
$region0: #{lstm_forward_packed.1}
  #allocation0 [shape = 'u32[]', space=smem, size = 0x4, offset = 0x4, fixed_abs, tag = 'smem constant byte address 0x4 - core index']
  #allocation1 [shape = 'u32[144,128]{1,0:T(1,128)}', space=vmem, size = 0x12000, scoped, tag = 'internal scratch']
  #allocation2 [shape = 'f32[1,1]{1,0:T(1,128)S(1)}', space=vmem, size = 0x200, scoped, tag = 'scoped memory for lstm_forward_packed.1']
  %s0 = inlined_call_operand.vmem [shape: f32[12,512], index: 0, kind: input, shape index: {}]
  %s1 = inlined_call_operand.hbm [shape: bf16[128,512], index: 1, kind: input, shape index: {}]
  %s2 = inlined_call_operand.vmem [shape: f32[1,128], index: 2, kind: input, shape index: {}]
  %s3 = inlined_call_operand.<no memory space> [shape: f32[1,1], index: 3, kind: input, shape index: {}]
  %s4 = inlined_call_operand.hbm [shape: f32[1,1], index: 4, kind: output, shape index: {}]
  %s5 = sld [smem:[#allocation0]]
  $region30: #{lstm_forward_packed.1} parent=0
    _
  %s7 = ssub.s32 1, %s5
  %s8 = scalar_select 0, %s7, %s5
  %v9 = vstv %s3
  %10 = vst [vmem:[#allocation2] sm:$0x1] %v9
  $region1: #{lstm_forward_packed.1} parent=0
    #allocation3 [shape = 'u8[131072]{0}', space=vmem, size = 0x20000, scoped, tag = 'input window, operand 1, single buffered']
    #allocation4 [shape = 's32[1]{0}', space=sflag, size = 0x4, scoped, tag = 'scoped memory for lstm_forward_packed.1']
    #allocation5 [shape = 's32[1]{0}', space=sflag, size = 0x4, scoped, tag = 'scoped memory for lstm_forward_packed.1']
    #allocation6 [shape = 'u8[512]{0}', space=vmem, size = 0x400, scoped, tag = 'output window, operand 0, single buffered']
    %11 = vsyncpa [#allocation4], 0
    %12 = vsyncpa [#allocation5], 0
    // Predicated region
    $region2: #{lstm_forward_packed.1} parent=1 // pred_check
      _
    $region3: #{lstm_forward_packed.1} parent=1 // pred_check_branch
      %14 = sbr.rel (0) target = $region5
    $region4: #{lstm_forward_packed.1} parent=1 // pred_region
      _
    $region5: #{lstm_forward_packed.1} parent=1 // pred_fallthru
      _
    // Predicated region
    $region6: #{lstm_forward_packed.1} parent=1 // pred_check
      _
    $region7: #{lstm_forward_packed.1} parent=1 // pred_check_branch
      %16 = sbr.rel (0) target = $region9
    $region8: #{lstm_forward_packed.1} parent=1 // pred_region
      %s18 = ssub.s32 4096, 4096
      %19 = vsyncadd [#allocation4], %s18
      %s20 = sshll.u32 [#allocation3], 4
      %s21 = int_to_ptr.vmem [resolvable:$true] %s20
      %26 = dma.hbm_to_vmem [thread:$0]  %s1, 4096, %s21, [#allocation4], 256, 256, 16
    $region9: #{lstm_forward_packed.1} parent=1 // pred_fallthru
      _
    // Predicated region
    $region10: #{lstm_forward_packed.1} parent=1 // pred_check
      _
    $region11: #{lstm_forward_packed.1} parent=1 // pred_check_branch
      %28 = sbr.rel (0) target = $region13
    $region12: #{lstm_forward_packed.1} parent=1 // pred_region
      _
    $region13: #{lstm_forward_packed.1} parent=1 // pred_fallthru
      _
    // Predicated region
    $region14: #{lstm_forward_packed.1} parent=1 // pred_check
      _
    $region15: #{lstm_forward_packed.1} parent=1 // pred_check_branch
      %30 = sbr.rel (0) target = $region17
    $region16: #{lstm_forward_packed.1} parent=1 // pred_region
      _
    $region17: #{lstm_forward_packed.1} parent=1 // pred_fallthru
      _
    // Predicated region
    $region18: #{lstm_forward_packed.1} parent=1 // pred_check
      _
    $region19: #{lstm_forward_packed.1} parent=1 // pred_check_branch
      %32 = sbr.rel (0) target = $region21
    $region20: #{lstm_forward_packed.1} parent=1 // pred_region
      %33 = dma.done [#allocation4], 4096
    $region21: #{lstm_forward_packed.1} parent=1 // pred_fallthru
      _
    %v35 = vld [vmem:[#allocation3] sm:$0xff]
    %v36 = vld [vmem:[#allocation3 + $0x8] sm:$0xff]
    %v37 = vld [vmem:[#allocation3 + $0x10] sm:$0xff]
    %v38 = vld [vmem:[#allocation3 + $0x18] sm:$0xff]
    %v39 = vld [vmem:[#allocation3 + $0x20] sm:$0xff]
    %v40 = vld [vmem:[#allocation3 + $0x28] sm:$0xff]
    %v41 = vld [vmem:[#allocation3 + $0x30] sm:$0xff]
    %v42 = vld [vmem:[#allocation3 + $0x38] sm:$0xff]
    %v43 = vld [vmem:[#allocation3 + $0x40] sm:$0xff]
    %v44 = vld [vmem:[#allocation3 + $0x48] sm:$0xff]
    %v45 = vld [vmem:[#allocation3 + $0x50] sm:$0xff]
    %v46 = vld [vmem:[#allocation3 + $0x58] sm:$0xff]
    %v47 = vld [vmem:[#allocation3 + $0x60] sm:$0xff]
    %v48 = vld [vmem:[#allocation3 + $0x68] sm:$0xff]
    %v49 = vld [vmem:[#allocation3 + $0x70] sm:$0xff]
    %v50 = vld [vmem:[#allocation3 + $0x78] sm:$0xff]
    %v51 = vld [vmem:[#allocation3 + $0x80] sm:$0xff]
    %v52 = vld [vmem:[#allocation3 + $0x88] sm:$0xff]
    %v53 = vld [vmem:[#allocation3 + $0x90] sm:$0xff]
    %v54 = vld [vmem:[#allocation3 + $0x98] sm:$0xff]
    %v55 = vld [vmem:[#allocation3 + $0xa0] sm:$0xff]
    %v56 = vld [vmem:[#allocation3 + $0xa8] sm:$0xff]
    %v57 = vld [vmem:[#allocation3 + $0xb0] sm:$0xff]
    %v58 = vld [vmem:[#allocation3 + $0xb8] sm:$0xff]
    %v59 = vld [vmem:[#allocation3 + $0xc0] sm:$0xff]
    %v60 = vld [vmem:[#allocation3 + $0xc8] sm:$0xff]
    %v61 = vld [vmem:[#allocation3 + $0xd0] sm:$0xff]
    %v62 = vld [vmem:[#allocation3 + $0xd8] sm:$0xff]
    %v63 = vld [vmem:[#allocation3 + $0xe0] sm:$0xff]
    %v64 = vld [vmem:[#allocation3 + $0xe8] sm:$0xff]
    %v65 = vld [vmem:[#allocation3 + $0xf0] sm:$0xff]
    %v66 = vld [vmem:[#allocation3 + $0xf8] sm:$0xff]
    %v67 = vld [vmem:[%s0] ss:$8 sm:$0xf]
    %v100 = vunpack.c.l.b16 %v35
    %v101 = vunpack.c.h.b16 %v35
    %v102 = vunpack.c.l.b16 %v36
    %v103 = vunpack.c.h.b16 %v36
    %v104 = vunpack.c.l.b16 %v37
    %v105 = vunpack.c.h.b16 %v37
    %v106 = vunpack.c.l.b16 %v38
    %v107 = vunpack.c.h.b16 %v38
    %v108 = vunpack.c.l.b16 %v39
    %v109 = vunpack.c.h.b16 %v39
    %v110 = vunpack.c.l.b16 %v40
    %v111 = vunpack.c.h.b16 %v40
    %v112 = vunpack.c.l.b16 %v41
    %v113 = vunpack.c.h.b16 %v41
    %v114 = vunpack.c.l.b16 %v42
    %v115 = vunpack.c.h.b16 %v42
    %v116 = vunpack.c.l.b16 %v43
    %v117 = vunpack.c.h.b16 %v43
    %v118 = vunpack.c.l.b16 %v44
    %v119 = vunpack.c.h.b16 %v44
    %v120 = vunpack.c.l.b16 %v45
    %v121 = vunpack.c.h.b16 %v45
    %v122 = vunpack.c.l.b16 %v46
    %v123 = vunpack.c.h.b16 %v46
    %v124 = vunpack.c.l.b16 %v47
    %v125 = vunpack.c.h.b16 %v47
    %v126 = vunpack.c.l.b16 %v48
    %v127 = vunpack.c.h.b16 %v48
    %v128 = vunpack.c.l.b16 %v49
    %v129 = vunpack.c.h.b16 %v49
    %v130 = vunpack.c.l.b16 %v50
    %v131 = vunpack.c.h.b16 %v50
    %v132 = vunpack.c.l.b16 %v51
    %v133 = vunpack.c.h.b16 %v51
    %v134 = vunpack.c.l.b16 %v52
    %v135 = vunpack.c.h.b16 %v52
    %v136 = vunpack.c.l.b16 %v53
    %v137 = vunpack.c.h.b16 %v53
    %v138 = vunpack.c.l.b16 %v54
    %v139 = vunpack.c.h.b16 %v54
    %v140 = vunpack.c.l.b16 %v55
    %v141 = vunpack.c.h.b16 %v55
    %v142 = vunpack.c.l.b16 %v56
    %v143 = vunpack.c.h.b16 %v56
    %v144 = vunpack.c.l.b16 %v57
    %v145 = vunpack.c.h.b16 %v57
    %v146 = vunpack.c.l.b16 %v58
    %v147 = vunpack.c.h.b16 %v58
    %v148 = vunpack.c.l.b16 %v59
    %v149 = vunpack.c.h.b16 %v59
    %v150 = vunpack.c.l.b16 %v60
    %v151 = vunpack.c.h.b16 %v60
    %v152 = vunpack.c.l.b16 %v61
    %v153 = vunpack.c.h.b16 %v61
    %v154 = vunpack.c.l.b16 %v62
    %v155 = vunpack.c.h.b16 %v62
    %v156 = vunpack.c.l.b16 %v63
    %v157 = vunpack.c.h.b16 %v63
    %v158 = vunpack.c.l.b16 %v64
    %v159 = vunpack.c.h.b16 %v64
    %v160 = vunpack.c.l.b16 %v65
    %v161 = vunpack.c.h.b16 %v65
    %v162 = vunpack.c.l.b16 %v66
    %v163 = vunpack.c.h.b16 %v66
    %v164 = vpack.c.b16 %v104, %v100
    %v165 = vpack.c.b16 %v105, %v101
    %v166 = vpack.c.b16 %v106, %v102
    %v167 = vpack.c.b16 %v107, %v103
    %v168 = vpack.c.b16 %v112, %v108
    %v169 = vpack.c.b16 %v113, %v109
    %v170 = vpack.c.b16 %v114, %v110
    %v171 = vpack.c.b16 %v115, %v111
    %v172 = vpack.c.b16 %v120, %v116
    %v173 = vpack.c.b16 %v121, %v117
    %v174 = vpack.c.b16 %v122, %v118
    %v175 = vpack.c.b16 %v123, %v119
    %v176 = vpack.c.b16 %v128, %v124
    %v177 = vpack.c.b16 %v129, %v125
    %v178 = vpack.c.b16 %v130, %v126
    %v179 = vpack.c.b16 %v131, %v127
    %v180 = vpack.c.b16 %v136, %v132
    %v181 = vpack.c.b16 %v137, %v133
    %v182 = vpack.c.b16 %v138, %v134
    %v183 = vpack.c.b16 %v139, %v135
    %v184 = vpack.c.b16 %v144, %v140
    %v185 = vpack.c.b16 %v145, %v141
    %v186 = vpack.c.b16 %v146, %v142
    %v187 = vpack.c.b16 %v147, %v143
    %v188 = vpack.c.b16 %v152, %v148
    %v189 = vpack.c.b16 %v153, %v149
    %v190 = vpack.c.b16 %v154, %v150
    %v191 = vpack.c.b16 %v155, %v151
    %v192 = vpack.c.b16 %v160, %v156
    %v193 = vpack.c.b16 %v161, %v157
    %v194 = vpack.c.b16 %v162, %v158
    %v195 = vpack.c.b16 %v163, %v159
    %v229 = vlaneseq
    %v230 = vshrl.u32 %v229, 7
    %v231 = vsub.s32 0, %v230
    %v232 = vrot.slane %v67, %v231
    %v233 = vlaneseq
    %v234 = vshrl.u32 %v233, 7
    %v235 = vsub.s32 1, %v234
    %v236 = vrot.slane %v67, %v235
    %v237 = vlaneseq
    %v238 = vshrl.u32 %v237, 7
    %v239 = vsub.s32 2, %v238
    %v240 = vrot.slane %v67, %v239
    %v241 = vlaneseq
    %v242 = vshrl.u32 %v241, 7
    %v243 = vsub.s32 3, %v242
    %v244 = vrot.slane %v67, %v243
    %249 = vmatprep.subr.bf16.mxu0 %v165
    %250 = vmatpush1.bf16.msra.mxu0 %v164
    %251 = vmatprep.subr.bf16.mxu0 %v169
    %252 = vmatpush1.bf16.msra.mxu0 %v168
    %253 = vmatprep.subr.bf16.mxu0 %v173
    %254 = vmatpush1.bf16.msra.mxu0 %v172
    %255 = vmatprep.subr.bf16.mxu0 %v177
    %256 = vmatpush1.bf16.msra.mxu0 %v176
    %257 = vmatprep.subr.bf16.mxu0 %v181
    %258 = vmatpush1.bf16.msra.mxu0 %v180
    %259 = vmatprep.subr.bf16.mxu0 %v185
    %260 = vmatpush1.bf16.msra.mxu0 %v184
    %261 = vmatprep.subr.bf16.mxu0 %v189
    %262 = vmatpush1.bf16.msra.mxu0 %v188
    %263 = vmatprep.subr.bf16.mxu0 %v193
    %264 = vmatpush1.bf16.msra.mxu0 %v192
    %265 = vmatprep.subr.bf16.mxu0 0
    %266 = vmatpush1.bf16.msra.mxu0 0
    %267 = vmatprep.subr.bf16.mxu0 0
    %268 = vmatpush1.bf16.msra.mxu0 0
    %269 = vmatprep.subr.bf16.mxu0 0
    %270 = vmatpush1.bf16.msra.mxu0 0
    %271 = vmatprep.subr.bf16.mxu0 0
    %272 = vmatpush1.bf16.msra.mxu0 0
    %273 = vmatprep.subr.bf16.mxu0 0
    %274 = vmatpush1.bf16.msra.mxu0 0
    %275 = vmatprep.subr.bf16.mxu0 0
    %276 = vmatpush1.bf16.msra.mxu0 0
    %277 = vmatprep.subr.bf16.mxu0 0
    %278 = vmatpush1.bf16.msra.mxu0 0
    %279 = vmatprep.subr.bf16.mxu0 0
    %280 = vmatpush1.bf16.msra.mxu0 0
    %281 = vmatprep.mubr.bf16.mxu0 0
    %282 = vmatmul.mubr.bf16.gmra.mrb[0].mxu0 0
    %v283 = vpop.f32.mrb[0].mxu0
    %v284 = vadd.f32 %v232, %v283
    %v285 = vpop.f32.mrb[0].mxu0
    %v286 = vadd.f32 %v236, %v285
    %v287 = vpop.f32.mrb[0].mxu0
    %v288 = vpop.f32.mrb[0].mxu0
    %289 = vdwg.mxu0
    %290 = vmatprep.subr.bf16.mxu0 %v167
    %291 = vmatpush1.bf16.msra.mxu0 %v166
    %292 = vmatprep.subr.bf16.mxu0 %v171
    %293 = vmatpush1.bf16.msra.mxu0 %v170
    %294 = vmatprep.subr.bf16.mxu0 %v175
    %295 = vmatpush1.bf16.msra.mxu0 %v174
    %296 = vmatprep.subr.bf16.mxu0 %v179
    %297 = vmatpush1.bf16.msra.mxu0 %v178
    %298 = vmatprep.subr.bf16.mxu0 %v183
    %299 = vmatpush1.bf16.msra.mxu0 %v182
    %300 = vmatprep.subr.bf16.mxu0 %v187
    %301 = vmatpush1.bf16.msra.mxu0 %v186
    %302 = vmatprep.subr.bf16.mxu0 %v191
    %303 = vmatpush1.bf16.msra.mxu0 %v190
    %304 = vmatprep.subr.bf16.mxu0 %v195
    %305 = vmatpush1.bf16.msra.mxu0 %v194
    %306 = vmatprep.subr.bf16.mxu0 0
    %307 = vmatpush1.bf16.msra.mxu0 0
    %308 = vmatprep.subr.bf16.mxu0 0
    %309 = vmatpush1.bf16.msra.mxu0 0
    %310 = vmatprep.subr.bf16.mxu0 0
    %311 = vmatpush1.bf16.msra.mxu0 0
    %312 = vmatprep.subr.bf16.mxu0 0
    %313 = vmatpush1.bf16.msra.mxu0 0
    %314 = vmatprep.subr.bf16.mxu0 0
    %315 = vmatpush1.bf16.msra.mxu0 0
    %316 = vmatprep.subr.bf16.mxu0 0
    %317 = vmatpush1.bf16.msra.mxu0 0
    %318 = vmatprep.subr.bf16.mxu0 0
    %319 = vmatpush1.bf16.msra.mxu0 0
    %320 = vmatprep.subr.bf16.mxu0 0
    %321 = vmatpush1.bf16.msra.mxu0 0
    %322 = vmatprep.mubr.bf16.mxu0 0
    %323 = vmatmul.mubr.bf16.gmra.mrb[0].mxu0 0
    %v324 = vpop.f32.mrb[0].mxu0
    %v325 = vadd.f32 %v240, %v324
    %v326 = vpop.f32.mrb[0].mxu0
    %v327 = vadd.f32 %v244, %v326
    %v328 = vpop.f32.mrb[0].mxu0
    %v329 = vpop.f32.mrb[0].mxu0
    %330 = vdwg.mxu0
    %v331 = vxor.u32 %v284, 2147483648
    %v332 = vxor.u32 %v286, 2147483648
    %v333 = vxor.u32 %v325, 2147483648
    %v334 = vmul.f32 %v331, 1.442695
    %v335 = vpow.pop %v334
    %v336 = vmul.f32 %v332, 1.442695
    %v337 = vpow.pop %v336
    %v338 = vmul.f32 %v333, 1.442695
    %v339 = vpow.pop %v338
    %v340 = vadd.f32 %v335, 1.0
    %v341 = vadd.f32 %v337, 1.0
    %v342 = vadd.f32 %v339, 1.0
    %v343 = vrcp.pop %v340
    %v344 = vmul.f32 1.0, %v343
    %v345 = vrcp.pop %v341
    %v346 = vmul.f32 1.0, %v345
    %v347 = vrcp.pop %v342
    %v348 = vmul.f32 1.0, %v347
    %v349 = vtanh.pop %v327
    %v350 = vmul.f32 %v346, 0.0
    %v351 = vmul.f32 %v344, %v349
    %v352 = vadd.f32 %v350, %v351
    %v353 = vtanh.pop %v352
    %v354 = vmul.f32 %v348, %v353
    %s355 = scalar_lea.vmem %s0, 1
    %v356 = vld [vmem:[%s355] ss:$8 sm:$0xf]
    %v357 = vpack.c.bf16 %v354, %v354
    %v359 = vlaneseq
    %v360 = vshrl.u32 %v359, 7
    %v361 = vsub.s32 0, %v360
    %v362 = vrot.slane %v356, %v361
    %v363 = vlaneseq
    %v364 = vshrl.u32 %v363, 7
    %v365 = vsub.s32 1, %v364
    %v366 = vrot.slane %v356, %v365
    %v367 = vlaneseq
    %v368 = vshrl.u32 %v367, 7
    %v369 = vsub.s32 2, %v368
    %v370 = vrot.slane %v356, %v369
    %v371 = vlaneseq
    %v372 = vshrl.u32 %v371, 7
    %v373 = vsub.s32 3, %v372
    %v374 = vrot.slane %v356, %v373
    %379 = vmatprep.subr.bf16.mxu0 %v165
    %380 = vmatpush1.bf16.msra.mxu0 %v164
    %381 = vmatprep.subr.bf16.mxu0 %v169
    %382 = vmatpush1.bf16.msra.mxu0 %v168
    %383 = vmatprep.subr.bf16.mxu0 %v173
    %384 = vmatpush1.bf16.msra.mxu0 %v172
    %385 = vmatprep.subr.bf16.mxu0 %v177
    %386 = vmatpush1.bf16.msra.mxu0 %v176
    %387 = vmatprep.subr.bf16.mxu0 %v181
    %388 = vmatpush1.bf16.msra.mxu0 %v180
    %389 = vmatprep.subr.bf16.mxu0 %v185
    %390 = vmatpush1.bf16.msra.mxu0 %v184
    %391 = vmatprep.subr.bf16.mxu0 %v189
    %392 = vmatpush1.bf16.msra.mxu0 %v188
    %393 = vmatprep.subr.bf16.mxu0 %v193
    %394 = vmatpush1.bf16.msra.mxu0 %v192
    %395 = vmatprep.subr.bf16.mxu0 0
    %396 = vmatpush1.bf16.msra.mxu0 0
    %397 = vmatprep.subr.bf16.mxu0 0
    %398 = vmatpush1.bf16.msra.mxu0 0
    %399 = vmatprep.subr.bf16.mxu0 0
    %400 = vmatpush1.bf16.msra.mxu0 0
    %401 = vmatprep.subr.bf16.mxu0 0
    %402 = vmatpush1.bf16.msra.mxu0 0
    %403 = vmatprep.subr.bf16.mxu0 0
    %404 = vmatpush1.bf16.msra.mxu0 0
    %405 = vmatprep.subr.bf16.mxu0 0
    %406 = vmatpush1.bf16.msra.mxu0 0
    %407 = vmatprep.subr.bf16.mxu0 0
    %408 = vmatpush1.bf16.msra.mxu0 0
    %409 = vmatprep.subr.bf16.mxu0 0
    %410 = vmatpush1.bf16.msra.mxu0 0
    %411 = vmatprep.mubr.bf16.mxu0 0
    %412 = vmatmul.mubr.bf16.gmra.mrb[0].mxu0 %v357
    %v413 = vpop.f32.mrb[0].mxu0
    %v414 = vadd.f32 %v362, %v413
    %v415 = vpop.f32.mrb[0].mxu0
    %v416 = vadd.f32 %v366, %v415
    %v417 = vpop.f32.mrb[0].mxu0
    %v418 = vpop.f32.mrb[0].mxu0
    %419 = vdwg.mxu0
    %420 = vmatprep.subr.bf16.mxu0 %v167
    %421 = vmatpush1.bf16.msra.mxu0 %v166
    %422 = vmatprep.subr.bf16.mxu0 %v171
    %423 = vmatpush1.bf16.msra.mxu0 %v170
    %424 = vmatprep.subr.bf16.mxu0 %v175
    %425 = vmatpush1.bf16.msra.mxu0 %v174
    %426 = vmatprep.subr.bf16.mxu0 %v179
    %427 = vmatpush1.bf16.msra.mxu0 %v178
    %428 = vmatprep.subr.bf16.mxu0 %v183
    %429 = vmatpush1.bf16.msra.mxu0 %v182
    %430 = vmatprep.subr.bf16.mxu0 %v187
    %431 = vmatpush1.bf16.msra.mxu0 %v186
    %432 = vmatprep.subr.bf16.mxu0 %v191
    %433 = vmatpush1.bf16.msra.mxu0 %v190
    %434 = vmatprep.subr.bf16.mxu0 %v195
    %435 = vmatpush1.bf16.msra.mxu0 %v194
    %436 = vmatprep.subr.bf16.mxu0 0
    %437 = vmatpush1.bf16.msra.mxu0 0
    %438 = vmatprep.subr.bf16.mxu0 0
    %439 = vmatpush1.bf16.msra.mxu0 0
    %440 = vmatprep.subr.bf16.mxu0 0
    %441 = vmatpush1.bf16.msra.mxu0 0
    %442 = vmatprep.subr.bf16.mxu0 0
    %443 = vmatpush1.bf16.msra.mxu0 0
    %444 = vmatprep.subr.bf16.mxu0 0
    %445 = vmatpush1.bf16.msra.mxu0 0
    %446 = vmatprep.subr.bf16.mxu0 0
    %447 = vmatpush1.bf16.msra.mxu0 0
    %448 = vmatprep.subr.bf16.mxu0 0
    %449 = vmatpush1.bf16.msra.mxu0 0
    %450 = vmatprep.subr.bf16.mxu0 0
    %451 = vmatpush1.bf16.msra.mxu0 0
    %452 = vmatprep.mubr.bf16.mxu0 0
    %453 = vmatmul.mubr.bf16.gmra.mrb[0].mxu0 %v357
    %v454 = vpop.f32.mrb[0].mxu0
    %v455 = vadd.f32 %v370, %v454
    %v456 = vpop.f32.mrb[0].mxu0
    %v457 = vadd.f32 %v374, %v456
    %v458 = vpop.f32.mrb[0].mxu0
    %v459 = vpop.f32.mrb[0].mxu0
    %460 = vdwg.mxu0
    %v461 = vxor.u32 %v414, 2147483648
    %v462 = vxor.u32 %v416, 2147483648
    %v463 = vxor.u32 %v455, 2147483648
    %v464 = vmul.f32 %v461, 1.442695
    %v465 = vpow.pop %v464
    %v466 = vmul.f32 %v462, 1.442695
    %v467 = vpow.pop %v466
    %v468 = vmul.f32 %v463, 1.442695
    %v469 = vpow.pop %v468
    %v470 = vadd.f32 %v465, 1.0
    %v471 = vadd.f32 %v467, 1.0
    %v472 = vadd.f32 %v469, 1.0
    %v473 = vrcp.pop %v470
    %v474 = vmul.f32 1.0, %v473
    %v475 = vrcp.pop %v471
    %v476 = vmul.f32 1.0, %v475
    %v477 = vrcp.pop %v472
    %v478 = vmul.f32 1.0, %v477
    %v479 = vtanh.pop %v457
    %v480 = vmul.f32 %v476, %v352
    %v481 = vmul.f32 %v474, %v479
    %v482 = vadd.f32 %v480, %v481
    %v483 = vtanh.pop %v482
    %v484 = vmul.f32 %v478, %v483
    %s485 = scalar_lea.vmem %s0, 2
    %v486 = vld [vmem:[%s485] ss:$8 sm:$0xf]
    %v487 = vpack.c.bf16 %v484, %v484
    %v489 = vlaneseq
    %v490 = vshrl.u32 %v489, 7
    %v491 = vsub.s32 0, %v490
    %v492 = vrot.slane %v486, %v491
    %v493 = vlaneseq
    %v494 = vshrl.u32 %v493, 7
    %v495 = vsub.s32 1, %v494
    %v496 = vrot.slane %v486, %v495
    %v497 = vlaneseq
    %v498 = vshrl.u32 %v497, 7
    %v499 = vsub.s32 2, %v498
    %v500 = vrot.slane %v486, %v499
    %v501 = vlaneseq
    %v502 = vshrl.u32 %v501, 7
    %v503 = vsub.s32 3, %v502
    %v504 = vrot.slane %v486, %v503
    %509 = vmatprep.subr.bf16.mxu0 %v165
    %510 = vmatpush1.bf16.msra.mxu0 %v164
    %511 = vmatprep.subr.bf16.mxu0 %v169
    %512 = vmatpush1.bf16.msra.mxu0 %v168
    %513 = vmatprep.subr.bf16.mxu0 %v173
    %514 = vmatpush1.bf16.msra.mxu0 %v172
    %515 = vmatprep.subr.bf16.mxu0 %v177
    %516 = vmatpush1.bf16.msra.mxu0 %v176
    %517 = vmatprep.subr.bf16.mxu0 %v181
    %518 = vmatpush1.bf16.msra.mxu0 %v180
    %519 = vmatprep.subr.bf16.mxu0 %v185
    %520 = vmatpush1.bf16.msra.mxu0 %v184
    %521 = vmatprep.subr.bf16.mxu0 %v189
    %522 = vmatpush1.bf16.msra.mxu0 %v188
    %523 = vmatprep.subr.bf16.mxu0 %v193
    %524 = vmatpush1.bf16.msra.mxu0 %v192
    %525 = vmatprep.subr.bf16.mxu0 0
    %526 = vmatpush1.bf16.msra.mxu0 0
    %527 = vmatprep.subr.bf16.mxu0 0
    %528 = vmatpush1.bf16.msra.mxu0 0
    %529 = vmatprep.subr.bf16.mxu0 0
    %530 = vmatpush1.bf16.msra.mxu0 0
    %531 = vmatprep.subr.bf16.mxu0 0
    %532 = vmatpush1.bf16.msra.mxu0 0
    %533 = vmatprep.subr.bf16.mxu0 0
    %534 = vmatpush1.bf16.msra.mxu0 0
    %535 = vmatprep.subr.bf16.mxu0 0
    %536 = vmatpush1.bf16.msra.mxu0 0
    %537 = vmatprep.subr.bf16.mxu0 0
    %538 = vmatpush1.bf16.msra.mxu0 0
    %539 = vmatprep.subr.bf16.mxu0 0
    %540 = vmatpush1.bf16.msra.mxu0 0
    %541 = vmatprep.mubr.bf16.mxu0 0
    %542 = vmatmul.mubr.bf16.gmra.mrb[0].mxu0 %v487
    %v543 = vpop.f32.mrb[0].mxu0
    %v544 = vadd.f32 %v492, %v543
    %v545 = vpop.f32.mrb[0].mxu0
    %v546 = vadd.f32 %v496, %v545
    %v547 = vpop.f32.mrb[0].mxu0
    %v548 = vpop.f32.mrb[0].mxu0
    %549 = vdwg.mxu0
    %550 = vmatprep.subr.bf16.mxu0 %v167
    %551 = vmatpush1.bf16.msra.mxu0 %v166
    %552 = vmatprep.subr.bf16.mxu0 %v171
    %553 = vmatpush1.bf16.msra.mxu0 %v170
    %554 = vmatprep.subr.bf16.mxu0 %v175
    %555 = vmatpush1.bf16.msra.mxu0 %v174
    %556 = vmatprep.subr.bf16.mxu0 %v179
    %557 = vmatpush1.bf16.msra.mxu0 %v178
    %558 = vmatprep.subr.bf16.mxu0 %v183
    %559 = vmatpush1.bf16.msra.mxu0 %v182
    %560 = vmatprep.subr.bf16.mxu0 %v187
    %561 = vmatpush1.bf16.msra.mxu0 %v186
    %562 = vmatprep.subr.bf16.mxu0 %v191
    %563 = vmatpush1.bf16.msra.mxu0 %v190
    %564 = vmatprep.subr.bf16.mxu0 %v195
    %565 = vmatpush1.bf16.msra.mxu0 %v194
    %566 = vmatprep.subr.bf16.mxu0 0
    %567 = vmatpush1.bf16.msra.mxu0 0
    %568 = vmatprep.subr.bf16.mxu0 0
    %569 = vmatpush1.bf16.msra.mxu0 0
    %570 = vmatprep.subr.bf16.mxu0 0
    %571 = vmatpush1.bf16.msra.mxu0 0
    %572 = vmatprep.subr.bf16.mxu0 0
    %573 = vmatpush1.bf16.msra.mxu0 0
    %574 = vmatprep.subr.bf16.mxu0 0
    %575 = vmatpush1.bf16.msra.mxu0 0
    %576 = vmatprep.subr.bf16.mxu0 0
    %577 = vmatpush1.bf16.msra.mxu0 0
    %578 = vmatprep.subr.bf16.mxu0 0
    %579 = vmatpush1.bf16.msra.mxu0 0
    %580 = vmatprep.subr.bf16.mxu0 0
    %581 = vmatpush1.bf16.msra.mxu0 0
    %582 = vmatprep.mubr.bf16.mxu0 0
    %583 = vmatmul.mubr.bf16.gmra.mrb[0].mxu0 %v487
    %v584 = vpop.f32.mrb[0].mxu0
    %v585 = vadd.f32 %v500, %v584
    %v586 = vpop.f32.mrb[0].mxu0
    %v587 = vadd.f32 %v504, %v586
    %v588 = vpop.f32.mrb[0].mxu0
    %v589 = vpop.f32.mrb[0].mxu0
    %590 = vdwg.mxu0
    %v591 = vxor.u32 %v544, 2147483648
    %v592 = vxor.u32 %v546, 2147483648
    %v593 = vxor.u32 %v585, 2147483648
    %v594 = vmul.f32 %v591, 1.442695
    %v595 = vpow.pop %v594
    %v596 = vmul.f32 %v592, 1.442695
    %v597 = vpow.pop %v596
    %v598 = vmul.f32 %v593, 1.442695
    %v599 = vpow.pop %v598
    %v600 = vadd.f32 %v595, 1.0
    %v601 = vadd.f32 %v597, 1.0
    %v602 = vadd.f32 %v599, 1.0
    %v603 = vrcp.pop %v600
    %v604 = vmul.f32 1.0, %v603
    %v605 = vrcp.pop %v601
    %v606 = vmul.f32 1.0, %v605
    %v607 = vrcp.pop %v602
    %v608 = vmul.f32 1.0, %v607
    %v609 = vtanh.pop %v587
    %v610 = vmul.f32 %v606, %v482
    %v611 = vmul.f32 %v604, %v609
    %v612 = vadd.f32 %v610, %v611
    %v613 = vtanh.pop %v612
    %v614 = vmul.f32 %v608, %v613
    %s615 = scalar_lea.vmem %s0, 3
    %v616 = vld [vmem:[%s615] ss:$8 sm:$0xf]
    %v617 = vpack.c.bf16 %v614, %v614
    %v619 = vlaneseq
    %v620 = vshrl.u32 %v619, 7
    %v621 = vsub.s32 0, %v620
    %v622 = vrot.slane %v616, %v621
    %v623 = vlaneseq
    %v624 = vshrl.u32 %v623, 7
    %v625 = vsub.s32 1, %v624
    %v626 = vrot.slane %v616, %v625
    %v627 = vlaneseq
    %v628 = vshrl.u32 %v627, 7
    %v629 = vsub.s32 2, %v628
    %v630 = vrot.slane %v616, %v629
    %v631 = vlaneseq
    %v632 = vshrl.u32 %v631, 7
    %v633 = vsub.s32 3, %v632
    %v634 = vrot.slane %v616, %v633
    %639 = vmatprep.subr.bf16.mxu0 %v165
    %640 = vmatpush1.bf16.msra.mxu0 %v164
    %641 = vmatprep.subr.bf16.mxu0 %v169
    %642 = vmatpush1.bf16.msra.mxu0 %v168
    %643 = vmatprep.subr.bf16.mxu0 %v173
    %644 = vmatpush1.bf16.msra.mxu0 %v172
    %645 = vmatprep.subr.bf16.mxu0 %v177
    %646 = vmatpush1.bf16.msra.mxu0 %v176
    %647 = vmatprep.subr.bf16.mxu0 %v181
    %648 = vmatpush1.bf16.msra.mxu0 %v180
    %649 = vmatprep.subr.bf16.mxu0 %v185
    %650 = vmatpush1.bf16.msra.mxu0 %v184
    %651 = vmatprep.subr.bf16.mxu0 %v189
    %652 = vmatpush1.bf16.msra.mxu0 %v188
    %653 = vmatprep.subr.bf16.mxu0 %v193
    %654 = vmatpush1.bf16.msra.mxu0 %v192
    %655 = vmatprep.subr.bf16.mxu0 0
    %656 = vmatpush1.bf16.msra.mxu0 0
    %657 = vmatprep.subr.bf16.mxu0 0
    %658 = vmatpush1.bf16.msra.mxu0 0
    %659 = vmatprep.subr.bf16.mxu0 0
    %660 = vmatpush1.bf16.msra.mxu0 0
    %661 = vmatprep.subr.bf16.mxu0 0
    %662 = vmatpush1.bf16.msra.mxu0 0
    %663 = vmatprep.subr.bf16.mxu0 0
    %664 = vmatpush1.bf16.msra.mxu0 0
    %665 = vmatprep.subr.bf16.mxu0 0
    %666 = vmatpush1.bf16.msra.mxu0 0
    %667 = vmatprep.subr.bf16.mxu0 0
    %668 = vmatpush1.bf16.msra.mxu0 0
    %669 = vmatprep.subr.bf16.mxu0 0
    %670 = vmatpush1.bf16.msra.mxu0 0
    %671 = vmatprep.mubr.bf16.mxu0 0
    %672 = vmatmul.mubr.bf16.gmra.mrb[0].mxu0 %v617
    %v673 = vpop.f32.mrb[0].mxu0
    %v674 = vadd.f32 %v622, %v673
    %v675 = vpop.f32.mrb[0].mxu0
    %v676 = vadd.f32 %v626, %v675
    %v677 = vpop.f32.mrb[0].mxu0
    %v678 = vpop.f32.mrb[0].mxu0
    %679 = vdwg.mxu0
    %680 = vmatprep.subr.bf16.mxu0 %v167
    %681 = vmatpush1.bf16.msra.mxu0 %v166
    %682 = vmatprep.subr.bf16.mxu0 %v171
    %683 = vmatpush1.bf16.msra.mxu0 %v170
    %684 = vmatprep.subr.bf16.mxu0 %v175
    %685 = vmatpush1.bf16.msra.mxu0 %v174
    %686 = vmatprep.subr.bf16.mxu0 %v179
    %687 = vmatpush1.bf16.msra.mxu0 %v178
    %688 = vmatprep.subr.bf16.mxu0 %v183
    %689 = vmatpush1.bf16.msra.mxu0 %v182
    %690 = vmatprep.subr.bf16.mxu0 %v187
    %691 = vmatpush1.bf16.msra.mxu0 %v186
    %692 = vmatprep.subr.bf16.mxu0 %v191
    %693 = vmatpush1.bf16.msra.mxu0 %v190
    %694 = vmatprep.subr.bf16.mxu0 %v195
    %695 = vmatpush1.bf16.msra.mxu0 %v194
    %696 = vmatprep.subr.bf16.mxu0 0
    %697 = vmatpush1.bf16.msra.mxu0 0
    %698 = vmatprep.subr.bf16.mxu0 0
    %699 = vmatpush1.bf16.msra.mxu0 0
    %700 = vmatprep.subr.bf16.mxu0 0
    %701 = vmatpush1.bf16.msra.mxu0 0
    %702 = vmatprep.subr.bf16.mxu0 0
    %703 = vmatpush1.bf16.msra.mxu0 0
    %704 = vmatprep.subr.bf16.mxu0 0
    %705 = vmatpush1.bf16.msra.mxu0 0
    %706 = vmatprep.subr.bf16.mxu0 0
    %707 = vmatpush1.bf16.msra.mxu0 0
    %708 = vmatprep.subr.bf16.mxu0 0
    %709 = vmatpush1.bf16.msra.mxu0 0
    %710 = vmatprep.subr.bf16.mxu0 0
    %711 = vmatpush1.bf16.msra.mxu0 0
    %712 = vmatprep.mubr.bf16.mxu0 0
    %713 = vmatmul.mubr.bf16.gmra.mrb[0].mxu0 %v617
    %v714 = vpop.f32.mrb[0].mxu0
    %v715 = vadd.f32 %v630, %v714
    %v716 = vpop.f32.mrb[0].mxu0
    %v717 = vadd.f32 %v634, %v716
    %v718 = vpop.f32.mrb[0].mxu0
    %v719 = vpop.f32.mrb[0].mxu0
    %720 = vdwg.mxu0
    %v721 = vxor.u32 %v674, 2147483648
    %v722 = vxor.u32 %v676, 2147483648
    %v723 = vxor.u32 %v715, 2147483648
    %v724 = vmul.f32 %v721, 1.442695
    %v725 = vpow.pop %v724
    %v726 = vmul.f32 %v722, 1.442695
    %v727 = vpow.pop %v726
    %v728 = vmul.f32 %v723, 1.442695
    %v729 = vpow.pop %v728
    %v730 = vadd.f32 %v725, 1.0
    %v731 = vadd.f32 %v727, 1.0
    %v732 = vadd.f32 %v729, 1.0
    %v733 = vrcp.pop %v730
    %v734 = vmul.f32 1.0, %v733
    %v735 = vrcp.pop %v731
    %v736 = vmul.f32 1.0, %v735
    %v737 = vrcp.pop %v732
    %v738 = vmul.f32 1.0, %v737
    %v739 = vtanh.pop %v717
    %v740 = vmul.f32 %v736, %v612
    %v741 = vmul.f32 %v734, %v739
    %v742 = vadd.f32 %v740, %v741
    %v743 = vtanh.pop %v742
    %v744 = vmul.f32 %v738, %v743
    %s745 = scalar_lea.vmem %s0, 4
    %v746 = vld [vmem:[%s745] ss:$8 sm:$0xf]
    %v747 = vpack.c.bf16 %v744, %v744
    %v749 = vlaneseq
    %v750 = vshrl.u32 %v749, 7
    %v751 = vsub.s32 0, %v750
    %v752 = vrot.slane %v746, %v751
    %v753 = vlaneseq
    %v754 = vshrl.u32 %v753, 7
    %v755 = vsub.s32 1, %v754
    %v756 = vrot.slane %v746, %v755
    %v757 = vlaneseq
    %v758 = vshrl.u32 %v757, 7
    %v759 = vsub.s32 2, %v758
    %v760 = vrot.slane %v746, %v759
    %v761 = vlaneseq
    %v762 = vshrl.u32 %v761, 7
    %v763 = vsub.s32 3, %v762
    %v764 = vrot.slane %v746, %v763
    %769 = vmatprep.subr.bf16.mxu0 %v165
    %770 = vmatpush1.bf16.msra.mxu0 %v164
    %771 = vmatprep.subr.bf16.mxu0 %v169
    %772 = vmatpush1.bf16.msra.mxu0 %v168
    %773 = vmatprep.subr.bf16.mxu0 %v173
    %774 = vmatpush1.bf16.msra.mxu0 %v172
    %775 = vmatprep.subr.bf16.mxu0 %v177
    %776 = vmatpush1.bf16.msra.mxu0 %v176
    %777 = vmatprep.subr.bf16.mxu0 %v181
    %778 = vmatpush1.bf16.msra.mxu0 %v180
    %779 = vmatprep.subr.bf16.mxu0 %v185
    %780 = vmatpush1.bf16.msra.mxu0 %v184
    %781 = vmatprep.subr.bf16.mxu0 %v189
    %782 = vmatpush1.bf16.msra.mxu0 %v188
    %783 = vmatprep.subr.bf16.mxu0 %v193
    %784 = vmatpush1.bf16.msra.mxu0 %v192
    %785 = vmatprep.subr.bf16.mxu0 0
    %786 = vmatpush1.bf16.msra.mxu0 0
    %787 = vmatprep.subr.bf16.mxu0 0
    %788 = vmatpush1.bf16.msra.mxu0 0
    %789 = vmatprep.subr.bf16.mxu0 0
    %790 = vmatpush1.bf16.msra.mxu0 0
    %791 = vmatprep.subr.bf16.mxu0 0
    %792 = vmatpush1.bf16.msra.mxu0 0
    %793 = vmatprep.subr.bf16.mxu0 0
    %794 = vmatpush1.bf16.msra.mxu0 0
    %795 = vmatprep.subr.bf16.mxu0 0
    %796 = vmatpush1.bf16.msra.mxu0 0
    %797 = vmatprep.subr.bf16.mxu0 0
    %798 = vmatpush1.bf16.msra.mxu0 0
    %799 = vmatprep.subr.bf16.mxu0 0
    %800 = vmatpush1.bf16.msra.mxu0 0
    %801 = vmatprep.mubr.bf16.mxu0 0
    %802 = vmatmul.mubr.bf16.gmra.mrb[0].mxu0 %v747
    %v803 = vpop.f32.mrb[0].mxu0
    %v804 = vadd.f32 %v752, %v803
    %v805 = vpop.f32.mrb[0].mxu0
    %v806 = vadd.f32 %v756, %v805
    %v807 = vpop.f32.mrb[0].mxu0
    %v808 = vpop.f32.mrb[0].mxu0
    %809 = vdwg.mxu0
    %810 = vmatprep.subr.bf16.mxu0 %v167
    %811 = vmatpush1.bf16.msra.mxu0 %v166
    %812 = vmatprep.subr.bf16.mxu0 %v171
    %813 = vmatpush1.bf16.msra.mxu0 %v170
    %814 = vmatprep.subr.bf16.mxu0 %v175
    %815 = vmatpush1.bf16.msra.mxu0 %v174
    %816 = vmatprep.subr.bf16.mxu0 %v179
    %817 = vmatpush1.bf16.msra.mxu0 %v178
    %818 = vmatprep.subr.bf16.mxu0 %v183
    %819 = vmatpush1.bf16.msra.mxu0 %v182
    %820 = vmatprep.subr.bf16.mxu0 %v187
    %821 = vmatpush1.bf16.msra.mxu0 %v186
    %822 = vmatprep.subr.bf16.mxu0 %v191
    %823 = vmatpush1.bf16.msra.mxu0 %v190
    %824 = vmatprep.subr.bf16.mxu0 %v195
    %825 = vmatpush1.bf16.msra.mxu0 %v194
    %826 = vmatprep.subr.bf16.mxu0 0
    %827 = vmatpush1.bf16.msra.mxu0 0
    %828 = vmatprep.subr.bf16.mxu0 0
    %829 = vmatpush1.bf16.msra.mxu0 0
    %830 = vmatprep.subr.bf16.mxu0 0
    %831 = vmatpush1.bf16.msra.mxu0 0
    %832 = vmatprep.subr.bf16.mxu0 0
    %833 = vmatpush1.bf16.msra.mxu0 0
    %834 = vmatprep.subr.bf16.mxu0 0
    %835 = vmatpush1.bf16.msra.mxu0 0
    %836 = vmatprep.subr.bf16.mxu0 0
    %837 = vmatpush1.bf16.msra.mxu0 0
    %838 = vmatprep.subr.bf16.mxu0 0
    %839 = vmatpush1.bf16.msra.mxu0 0
    %840 = vmatprep.subr.bf16.mxu0 0
    %841 = vmatpush1.bf16.msra.mxu0 0
    %842 = vmatprep.mubr.bf16.mxu0 0
    %843 = vmatmul.mubr.bf16.gmra.mrb[0].mxu0 %v747
    %v844 = vpop.f32.mrb[0].mxu0
    %v845 = vadd.f32 %v760, %v844
    %v846 = vpop.f32.mrb[0].mxu0
    %v847 = vadd.f32 %v764, %v846
    %v848 = vpop.f32.mrb[0].mxu0
    %v849 = vpop.f32.mrb[0].mxu0
    %850 = vdwg.mxu0
    %v851 = vxor.u32 %v804, 2147483648
    %v852 = vxor.u32 %v806, 2147483648
    %v853 = vxor.u32 %v845, 2147483648
    %v854 = vmul.f32 %v851, 1.442695
    %v855 = vpow.pop %v854
    %v856 = vmul.f32 %v852, 1.442695
    %v857 = vpow.pop %v856
    %v858 = vmul.f32 %v853, 1.442695
    %v859 = vpow.pop %v858
    %v860 = vadd.f32 %v855, 1.0
    %v861 = vadd.f32 %v857, 1.0
    %v862 = vadd.f32 %v859, 1.0
    %v863 = vrcp.pop %v860
    %v864 = vmul.f32 1.0, %v863
    %v865 = vrcp.pop %v861
    %v866 = vmul.f32 1.0, %v865
    %v867 = vrcp.pop %v862
    %v868 = vmul.f32 1.0, %v867
    %v869 = vtanh.pop %v847
    %v870 = vmul.f32 %v866, %v742
    %v871 = vmul.f32 %v864, %v869
    %v872 = vadd.f32 %v870, %v871
    %v873 = vtanh.pop %v872
    %v874 = vmul.f32 %v868, %v873
    %s875 = scalar_lea.vmem %s0, 5
    %v876 = vld [vmem:[%s875] ss:$8 sm:$0xf]
    %v877 = vpack.c.bf16 %v874, %v874
    %v879 = vlaneseq
    %v880 = vshrl.u32 %v879, 7
    %v881 = vsub.s32 0, %v880
    %v882 = vrot.slane %v876, %v881
    %v883 = vlaneseq
    %v884 = vshrl.u32 %v883, 7
    %v885 = vsub.s32 1, %v884
    %v886 = vrot.slane %v876, %v885
    %v887 = vlaneseq
    %v888 = vshrl.u32 %v887, 7
    %v889 = vsub.s32 2, %v888
    %v890 = vrot.slane %v876, %v889
    %v891 = vlaneseq
    %v892 = vshrl.u32 %v891, 7
    %v893 = vsub.s32 3, %v892
    %v894 = vrot.slane %v876, %v893
    %899 = vmatprep.subr.bf16.mxu0 %v165
    %900 = vmatpush1.bf16.msra.mxu0 %v164
    %901 = vmatprep.subr.bf16.mxu0 %v169
    %902 = vmatpush1.bf16.msra.mxu0 %v168
    %903 = vmatprep.subr.bf16.mxu0 %v173
    %904 = vmatpush1.bf16.msra.mxu0 %v172
    %905 = vmatprep.subr.bf16.mxu0 %v177
    %906 = vmatpush1.bf16.msra.mxu0 %v176
    %907 = vmatprep.subr.bf16.mxu0 %v181
    %908 = vmatpush1.bf16.msra.mxu0 %v180
    %909 = vmatprep.subr.bf16.mxu0 %v185
    %910 = vmatpush1.bf16.msra.mxu0 %v184
    %911 = vmatprep.subr.bf16.mxu0 %v189
    %912 = vmatpush1.bf16.msra.mxu0 %v188
    %913 = vmatprep.subr.bf16.mxu0 %v193
    %914 = vmatpush1.bf16.msra.mxu0 %v192
    %915 = vmatprep.subr.bf16.mxu0 0
    %916 = vmatpush1.bf16.msra.mxu0 0
    %917 = vmatprep.subr.bf16.mxu0 0
    %918 = vmatpush1.bf16.msra.mxu0 0
    %919 = vmatprep.subr.bf16.mxu0 0
    %920 = vmatpush1.bf16.msra.mxu0 0
    %921 = vmatprep.subr.bf16.mxu0 0
    %922 = vmatpush1.bf16.msra.mxu0 0
    %923 = vmatprep.subr.bf16.mxu0 0
    %924 = vmatpush1.bf16.msra.mxu0 0
    %925 = vmatprep.subr.bf16.mxu0 0
    %926 = vmatpush1.bf16.msra.mxu0 0
    %927 = vmatprep.subr.bf16.mxu0 0
    %928 = vmatpush1.bf16.msra.mxu0 0
    %929 = vmatprep.subr.bf16.mxu0 0
    %930 = vmatpush1.bf16.msra.mxu0 0
    %931 = vmatprep.mubr.bf16.mxu0 0
    %932 = vmatmul.mubr.bf16.gmra.mrb[0].mxu0 %v877
    %v933 = vpop.f32.mrb[0].mxu0
    %v934 = vadd.f32 %v882, %v933
    %v935 = vpop.f32.mrb[0].mxu0
    %v936 = vadd.f32 %v886, %v935
    %v937 = vpop.f32.mrb[0].mxu0
    %v938 = vpop.f32.mrb[0].mxu0
    %939 = vdwg.mxu0
    %940 = vmatprep.subr.bf16.mxu0 %v167
    %941 = vmatpush1.bf16.msra.mxu0 %v166
    %942 = vmatprep.subr.bf16.mxu0 %v171
    %943 = vmatpush1.bf16.msra.mxu0 %v170
    %944 = vmatprep.subr.bf16.mxu0 %v175
    %945 = vmatpush1.bf16.msra.mxu0 %v174
    %946 = vmatprep.subr.bf16.mxu0 %v179
    %947 = vmatpush1.bf16.msra.mxu0 %v178
    %948 = vmatprep.subr.bf16.mxu0 %v183
    %949 = vmatpush1.bf16.msra.mxu0 %v182
    %950 = vmatprep.subr.bf16.mxu0 %v187
    %951 = vmatpush1.bf16.msra.mxu0 %v186
    %952 = vmatprep.subr.bf16.mxu0 %v191
    %953 = vmatpush1.bf16.msra.mxu0 %v190
    %954 = vmatprep.subr.bf16.mxu0 %v195
    %955 = vmatpush1.bf16.msra.mxu0 %v194
    %956 = vmatprep.subr.bf16.mxu0 0
    %957 = vmatpush1.bf16.msra.mxu0 0
    %958 = vmatprep.subr.bf16.mxu0 0
    %959 = vmatpush1.bf16.msra.mxu0 0
    %960 = vmatprep.subr.bf16.mxu0 0
    %961 = vmatpush1.bf16.msra.mxu0 0
    %962 = vmatprep.subr.bf16.mxu0 0
    %963 = vmatpush1.bf16.msra.mxu0 0
    %964 = vmatprep.subr.bf16.mxu0 0
    %965 = vmatpush1.bf16.msra.mxu0 0
    %966 = vmatprep.subr.bf16.mxu0 0
    %967 = vmatpush1.bf16.msra.mxu0 0
    %968 = vmatprep.subr.bf16.mxu0 0
    %969 = vmatpush1.bf16.msra.mxu0 0
    %970 = vmatprep.subr.bf16.mxu0 0
    %971 = vmatpush1.bf16.msra.mxu0 0
    %972 = vmatprep.mubr.bf16.mxu0 0
    %973 = vmatmul.mubr.bf16.gmra.mrb[0].mxu0 %v877
    %v974 = vpop.f32.mrb[0].mxu0
    %v975 = vadd.f32 %v890, %v974
    %v976 = vpop.f32.mrb[0].mxu0
    %v977 = vadd.f32 %v894, %v976
    %v978 = vpop.f32.mrb[0].mxu0
    %v979 = vpop.f32.mrb[0].mxu0
    %980 = vdwg.mxu0
    %v981 = vxor.u32 %v934, 2147483648
    %v982 = vxor.u32 %v936, 2147483648
    %v983 = vxor.u32 %v975, 2147483648
    %v984 = vmul.f32 %v981, 1.442695
    %v985 = vpow.pop %v984
    %v986 = vmul.f32 %v982, 1.442695
    %v987 = vpow.pop %v986
    %v988 = vmul.f32 %v983, 1.442695
    %v989 = vpow.pop %v988
    %v990 = vadd.f32 %v985, 1.0
    %v991 = vadd.f32 %v987, 1.0
    %v992 = vadd.f32 %v989, 1.0
    %v993 = vrcp.pop %v990
    %v994 = vmul.f32 1.0, %v993
    %v995 = vrcp.pop %v991
    %v996 = vmul.f32 1.0, %v995
    %v997 = vrcp.pop %v992
    %v998 = vmul.f32 1.0, %v997
    %v999 = vtanh.pop %v977
    %v1000 = vmul.f32 %v996, %v872
    %v1001 = vmul.f32 %v994, %v999
    %v1002 = vadd.f32 %v1000, %v1001
    %v1003 = vtanh.pop %v1002
    %v1004 = vmul.f32 %v998, %v1003
    %s1005 = scalar_lea.vmem %s0, 6
    %v1006 = vld [vmem:[%s1005] ss:$8 sm:$0xf]
    %v1007 = vpack.c.bf16 %v1004, %v1004
    %v1009 = vlaneseq
    %v1010 = vshrl.u32 %v1009, 7
    %v1011 = vsub.s32 0, %v1010
    %v1012 = vrot.slane %v1006, %v1011
    %v1013 = vlaneseq
    %v1014 = vshrl.u32 %v1013, 7
    %v1015 = vsub.s32 1, %v1014
    %v1016 = vrot.slane %v1006, %v1015
    %v1017 = vlaneseq
    %v1018 = vshrl.u32 %v1017, 7
    %v1019 = vsub.s32 2, %v1018
    %v1020 = vrot.slane %v1006, %v1019
    %v1021 = vlaneseq
    %v1022 = vshrl.u32 %v1021, 7
    %v1023 = vsub.s32 3, %v1022
    %v1024 = vrot.slane %v1006, %v1023
    %1029 = vmatprep.subr.bf16.mxu0 %v165
    %1030 = vmatpush1.bf16.msra.mxu0 %v164
    %1031 = vmatprep.subr.bf16.mxu0 %v169
    %1032 = vmatpush1.bf16.msra.mxu0 %v168
    %1033 = vmatprep.subr.bf16.mxu0 %v173
    %1034 = vmatpush1.bf16.msra.mxu0 %v172
    %1035 = vmatprep.subr.bf16.mxu0 %v177
    %1036 = vmatpush1.bf16.msra.mxu0 %v176
    %1037 = vmatprep.subr.bf16.mxu0 %v181
    %1038 = vmatpush1.bf16.msra.mxu0 %v180
    %1039 = vmatprep.subr.bf16.mxu0 %v185
    %1040 = vmatpush1.bf16.msra.mxu0 %v184
    %1041 = vmatprep.subr.bf16.mxu0 %v189
    %1042 = vmatpush1.bf16.msra.mxu0 %v188
    %1043 = vmatprep.subr.bf16.mxu0 %v193
    %1044 = vmatpush1.bf16.msra.mxu0 %v192
    %1045 = vmatprep.subr.bf16.mxu0 0
    %1046 = vmatpush1.bf16.msra.mxu0 0
    %1047 = vmatprep.subr.bf16.mxu0 0
    %1048 = vmatpush1.bf16.msra.mxu0 0
    %1049 = vmatprep.subr.bf16.mxu0 0
    %1050 = vmatpush1.bf16.msra.mxu0 0
    %1051 = vmatprep.subr.bf16.mxu0 0
    %1052 = vmatpush1.bf16.msra.mxu0 0
    %1053 = vmatprep.subr.bf16.mxu0 0
    %1054 = vmatpush1.bf16.msra.mxu0 0
    %1055 = vmatprep.subr.bf16.mxu0 0
    %1056 = vmatpush1.bf16.msra.mxu0 0
    %1057 = vmatprep.subr.bf16.mxu0 0
    %1058 = vmatpush1.bf16.msra.mxu0 0
    %1059 = vmatprep.subr.bf16.mxu0 0
    %1060 = vmatpush1.bf16.msra.mxu0 0
    %1061 = vmatprep.mubr.bf16.mxu0 0
    %1062 = vmatmul.mubr.bf16.gmra.mrb[0].mxu0 %v1007
    %v1063 = vpop.f32.mrb[0].mxu0
    %v1064 = vadd.f32 %v1012, %v1063
    %v1065 = vpop.f32.mrb[0].mxu0
    %v1066 = vadd.f32 %v1016, %v1065
    %v1067 = vpop.f32.mrb[0].mxu0
    %v1068 = vpop.f32.mrb[0].mxu0
    %1069 = vdwg.mxu0
    %1070 = vmatprep.subr.bf16.mxu0 %v167
    %1071 = vmatpush1.bf16.msra.mxu0 %v166
    %1072 = vmatprep.subr.bf16.mxu0 %v171
    %1073 = vmatpush1.bf16.msra.mxu0 %v170
    %1074 = vmatprep.subr.bf16.mxu0 %v175
    %1075 = vmatpush1.bf16.msra.mxu0 %v174
    %1076 = vmatprep.subr.bf16.mxu0 %v179
    %1077 = vmatpush1.bf16.msra.mxu0 %v178
    %1078 = vmatprep.subr.bf16.mxu0 %v183
    %1079 = vmatpush1.bf16.msra.mxu0 %v182
    %1080 = vmatprep.subr.bf16.mxu0 %v187
    %1081 = vmatpush1.bf16.msra.mxu0 %v186
    %1082 = vmatprep.subr.bf16.mxu0 %v191
    %1083 = vmatpush1.bf16.msra.mxu0 %v190
    %1084 = vmatprep.subr.bf16.mxu0 %v195
    %1085 = vmatpush1.bf16.msra.mxu0 %v194
    %1086 = vmatprep.subr.bf16.mxu0 0
    %1087 = vmatpush1.bf16.msra.mxu0 0
    %1088 = vmatprep.subr.bf16.mxu0 0
    %1089 = vmatpush1.bf16.msra.mxu0 0
    %1090 = vmatprep.subr.bf16.mxu0 0
    %1091 = vmatpush1.bf16.msra.mxu0 0
    %1092 = vmatprep.subr.bf16.mxu0 0
    %1093 = vmatpush1.bf16.msra.mxu0 0
    %1094 = vmatprep.subr.bf16.mxu0 0
    %1095 = vmatpush1.bf16.msra.mxu0 0
    %1096 = vmatprep.subr.bf16.mxu0 0
    %1097 = vmatpush1.bf16.msra.mxu0 0
    %1098 = vmatprep.subr.bf16.mxu0 0
    %1099 = vmatpush1.bf16.msra.mxu0 0
    %1100 = vmatprep.subr.bf16.mxu0 0
    %1101 = vmatpush1.bf16.msra.mxu0 0
    %1102 = vmatprep.mubr.bf16.mxu0 0
    %1103 = vmatmul.mubr.bf16.gmra.mrb[0].mxu0 %v1007
    %v1104 = vpop.f32.mrb[0].mxu0
    %v1105 = vadd.f32 %v1020, %v1104
    %v1106 = vpop.f32.mrb[0].mxu0
    %v1107 = vadd.f32 %v1024, %v1106
    %v1108 = vpop.f32.mrb[0].mxu0
    %v1109 = vpop.f32.mrb[0].mxu0
    %1110 = vdwg.mxu0
    %v1111 = vxor.u32 %v1064, 2147483648
    %v1112 = vxor.u32 %v1066, 2147483648
    %v1113 = vxor.u32 %v1105, 2147483648
    %v1114 = vmul.f32 %v1111, 1.442695
    %v1115 = vpow.pop %v1114
    %v1116 = vmul.f32 %v1112, 1.442695
    %v1117 = vpow.pop %v1116
    %v1118 = vmul.f32 %v1113, 1.442695
    %v1119 = vpow.pop %v1118
    %v1120 = vadd.f32 %v1115, 1.0
    %v1121 = vadd.f32 %v1117, 1.0
    %v1122 = vadd.f32 %v1119, 1.0
    %v1123 = vrcp.pop %v1120
    %v1124 = vmul.f32 1.0, %v1123
    %v1125 = vrcp.pop %v1121
    %v1126 = vmul.f32 1.0, %v1125
    %v1127 = vrcp.pop %v1122
    %v1128 = vmul.f32 1.0, %v1127
    %v1129 = vtanh.pop %v1107
    %v1130 = vmul.f32 %v1126, %v1002
    %v1131 = vmul.f32 %v1124, %v1129
    %v1132 = vadd.f32 %v1130, %v1131
    %v1133 = vtanh.pop %v1132
    %v1134 = vmul.f32 %v1128, %v1133
    %s1135 = scalar_lea.vmem %s0, 7
    %v1136 = vld [vmem:[%s1135] ss:$8 sm:$0xf]
    %v1137 = vpack.c.bf16 %v1134, %v1134
    %v1139 = vlaneseq
    %v1140 = vshrl.u32 %v1139, 7
    %v1141 = vsub.s32 0, %v1140
    %v1142 = vrot.slane %v1136, %v1141
    %v1143 = vlaneseq
    %v1144 = vshrl.u32 %v1143, 7
    %v1145 = vsub.s32 1, %v1144
    %v1146 = vrot.slane %v1136, %v1145
    %v1147 = vlaneseq
    %v1148 = vshrl.u32 %v1147, 7
    %v1149 = vsub.s32 2, %v1148
    %v1150 = vrot.slane %v1136, %v1149
    %v1151 = vlaneseq
    %v1152 = vshrl.u32 %v1151, 7
    %v1153 = vsub.s32 3, %v1152
    %v1154 = vrot.slane %v1136, %v1153
    %1159 = vmatprep.subr.bf16.mxu0 %v165
    %1160 = vmatpush1.bf16.msra.mxu0 %v164
    %1161 = vmatprep.subr.bf16.mxu0 %v169
    %1162 = vmatpush1.bf16.msra.mxu0 %v168
    %1163 = vmatprep.subr.bf16.mxu0 %v173
    %1164 = vmatpush1.bf16.msra.mxu0 %v172
    %1165 = vmatprep.subr.bf16.mxu0 %v177
    %1166 = vmatpush1.bf16.msra.mxu0 %v176
    %1167 = vmatprep.subr.bf16.mxu0 %v181
    %1168 = vmatpush1.bf16.msra.mxu0 %v180
    %1169 = vmatprep.subr.bf16.mxu0 %v185
    %1170 = vmatpush1.bf16.msra.mxu0 %v184
    %1171 = vmatprep.subr.bf16.mxu0 %v189
    %1172 = vmatpush1.bf16.msra.mxu0 %v188
    %1173 = vmatprep.subr.bf16.mxu0 %v193
    %1174 = vmatpush1.bf16.msra.mxu0 %v192
    %1175 = vmatprep.subr.bf16.mxu0 0
    %1176 = vmatpush1.bf16.msra.mxu0 0
    %1177 = vmatprep.subr.bf16.mxu0 0
    %1178 = vmatpush1.bf16.msra.mxu0 0
    %1179 = vmatprep.subr.bf16.mxu0 0
    %1180 = vmatpush1.bf16.msra.mxu0 0
    %1181 = vmatprep.subr.bf16.mxu0 0
    %1182 = vmatpush1.bf16.msra.mxu0 0
    %1183 = vmatprep.subr.bf16.mxu0 0
    %1184 = vmatpush1.bf16.msra.mxu0 0
    %1185 = vmatprep.subr.bf16.mxu0 0
    %1186 = vmatpush1.bf16.msra.mxu0 0
    %1187 = vmatprep.subr.bf16.mxu0 0
    %1188 = vmatpush1.bf16.msra.mxu0 0
    %1189 = vmatprep.subr.bf16.mxu0 0
    %1190 = vmatpush1.bf16.msra.mxu0 0
    %1191 = vmatprep.mubr.bf16.mxu0 0
    %1192 = vmatmul.mubr.bf16.gmra.mrb[0].mxu0 %v1137
    %v1193 = vpop.f32.mrb[0].mxu0
    %v1194 = vadd.f32 %v1142, %v1193
    %v1195 = vpop.f32.mrb[0].mxu0
    %v1196 = vadd.f32 %v1146, %v1195
    %v1197 = vpop.f32.mrb[0].mxu0
    %v1198 = vpop.f32.mrb[0].mxu0
    %1199 = vdwg.mxu0
    %1200 = vmatprep.subr.bf16.mxu0 %v167
    %1201 = vmatpush1.bf16.msra.mxu0 %v166
    %1202 = vmatprep.subr.bf16.mxu0 %v171
    %1203 = vmatpush1.bf16.msra.mxu0 %v170
    %1204 = vmatprep.subr.bf16.mxu0 %v175
    %1205 = vmatpush1.bf16.msra.mxu0 %v174
    %1206 = vmatprep.subr.bf16.mxu0 %v179
    %1207 = vmatpush1.bf16.msra.mxu0 %v178
    %1208 = vmatprep.subr.bf16.mxu0 %v183
    %1209 = vmatpush1.bf16.msra.mxu0 %v182
    %1210 = vmatprep.subr.bf16.mxu0 %v187
    %1211 = vmatpush1.bf16.msra.mxu0 %v186
    %1212 = vmatprep.subr.bf16.mxu0 %v191
    %1213 = vmatpush1.bf16.msra.mxu0 %v190
    %1214 = vmatprep.subr.bf16.mxu0 %v195
    %1215 = vmatpush1.bf16.msra.mxu0 %v194
    %1216 = vmatprep.subr.bf16.mxu0 0
    %1217 = vmatpush1.bf16.msra.mxu0 0
    %1218 = vmatprep.subr.bf16.mxu0 0
    %1219 = vmatpush1.bf16.msra.mxu0 0
    %1220 = vmatprep.subr.bf16.mxu0 0
    %1221 = vmatpush1.bf16.msra.mxu0 0
    %1222 = vmatprep.subr.bf16.mxu0 0
    %1223 = vmatpush1.bf16.msra.mxu0 0
    %1224 = vmatprep.subr.bf16.mxu0 0
    %1225 = vmatpush1.bf16.msra.mxu0 0
    %1226 = vmatprep.subr.bf16.mxu0 0
    %1227 = vmatpush1.bf16.msra.mxu0 0
    %1228 = vmatprep.subr.bf16.mxu0 0
    %1229 = vmatpush1.bf16.msra.mxu0 0
    %1230 = vmatprep.subr.bf16.mxu0 0
    %1231 = vmatpush1.bf16.msra.mxu0 0
    %1232 = vmatprep.mubr.bf16.mxu0 0
    %1233 = vmatmul.mubr.bf16.gmra.mrb[0].mxu0 %v1137
    %v1234 = vpop.f32.mrb[0].mxu0
    %v1235 = vadd.f32 %v1150, %v1234
    %v1236 = vpop.f32.mrb[0].mxu0
    %v1237 = vadd.f32 %v1154, %v1236
    %v1238 = vpop.f32.mrb[0].mxu0
    %v1239 = vpop.f32.mrb[0].mxu0
    %1240 = vdwg.mxu0
    %v1241 = vxor.u32 %v1194, 2147483648
    %v1242 = vxor.u32 %v1196, 2147483648
    %v1243 = vxor.u32 %v1235, 2147483648
    %v1244 = vmul.f32 %v1241, 1.442695
    %v1245 = vpow.pop %v1244
    %v1246 = vmul.f32 %v1242, 1.442695
    %v1247 = vpow.pop %v1246
    %v1248 = vmul.f32 %v1243, 1.442695
    %v1249 = vpow.pop %v1248
    %v1250 = vadd.f32 %v1245, 1.0
    %v1251 = vadd.f32 %v1247, 1.0
    %v1252 = vadd.f32 %v1249, 1.0
    %v1253 = vrcp.pop %v1250
    %v1254 = vmul.f32 1.0, %v1253
    %v1255 = vrcp.pop %v1251
    %v1256 = vmul.f32 1.0, %v1255
    %v1257 = vrcp.pop %v1252
    %v1258 = vmul.f32 1.0, %v1257
    %v1259 = vtanh.pop %v1237
    %v1260 = vmul.f32 %v1256, %v1132
    %v1261 = vmul.f32 %v1254, %v1259
    %v1262 = vadd.f32 %v1260, %v1261
    %v1263 = vtanh.pop %v1262
    %v1264 = vmul.f32 %v1258, %v1263
    %s1265 = scalar_lea.vmem %s0, 32
    %v1266 = vld [vmem:[%s1265] ss:$8 sm:$0xf]
    %v1267 = vpack.c.bf16 %v1264, %v1264
    %v1269 = vlaneseq
    %v1270 = vshrl.u32 %v1269, 7
    %v1271 = vsub.s32 0, %v1270
    %v1272 = vrot.slane %v1266, %v1271
    %v1273 = vlaneseq
    %v1274 = vshrl.u32 %v1273, 7
    %v1275 = vsub.s32 1, %v1274
    %v1276 = vrot.slane %v1266, %v1275
    %v1277 = vlaneseq
    %v1278 = vshrl.u32 %v1277, 7
    %v1279 = vsub.s32 2, %v1278
    %v1280 = vrot.slane %v1266, %v1279
    %v1281 = vlaneseq
    %v1282 = vshrl.u32 %v1281, 7
    %v1283 = vsub.s32 3, %v1282
    %v1284 = vrot.slane %v1266, %v1283
    %1289 = vmatprep.subr.bf16.mxu0 %v165
    %1290 = vmatpush1.bf16.msra.mxu0 %v164
    %1291 = vmatprep.subr.bf16.mxu0 %v169
    %1292 = vmatpush1.bf16.msra.mxu0 %v168
    %1293 = vmatprep.subr.bf16.mxu0 %v173
    %1294 = vmatpush1.bf16.msra.mxu0 %v172
    %1295 = vmatprep.subr.bf16.mxu0 %v177
    %1296 = vmatpush1.bf16.msra.mxu0 %v176
    %1297 = vmatprep.subr.bf16.mxu0 %v181
    %1298 = vmatpush1.bf16.msra.mxu0 %v180
    %1299 = vmatprep.subr.bf16.mxu0 %v185
    %1300 = vmatpush1.bf16.msra.mxu0 %v184
    %1301 = vmatprep.subr.bf16.mxu0 %v189
    %1302 = vmatpush1.bf16.msra.mxu0 %v188
    %1303 = vmatprep.subr.bf16.mxu0 %v193
    %1304 = vmatpush1.bf16.msra.mxu0 %v192
    %1305 = vmatprep.subr.bf16.mxu0 0
    %1306 = vmatpush1.bf16.msra.mxu0 0
    %1307 = vmatprep.subr.bf16.mxu0 0
    %1308 = vmatpush1.bf16.msra.mxu0 0
    %1309 = vmatprep.subr.bf16.mxu0 0
    %1310 = vmatpush1.bf16.msra.mxu0 0
    %1311 = vmatprep.subr.bf16.mxu0 0
    %1312 = vmatpush1.bf16.msra.mxu0 0
    %1313 = vmatprep.subr.bf16.mxu0 0
    %1314 = vmatpush1.bf16.msra.mxu0 0
    %1315 = vmatprep.subr.bf16.mxu0 0
    %1316 = vmatpush1.bf16.msra.mxu0 0
    %1317 = vmatprep.subr.bf16.mxu0 0
    %1318 = vmatpush1.bf16.msra.mxu0 0
    %1319 = vmatprep.subr.bf16.mxu0 0
    %1320 = vmatpush1.bf16.msra.mxu0 0
    %1321 = vmatprep.mubr.bf16.mxu0 0
    %1322 = vmatmul.mubr.bf16.gmra.mrb[0].mxu0 %v1267
    %v1323 = vpop.f32.mrb[0].mxu0
    %v1324 = vadd.f32 %v1272, %v1323
    %v1325 = vpop.f32.mrb[0].mxu0
    %v1326 = vadd.f32 %v1276, %v1325
    %v1327 = vpop.f32.mrb[0].mxu0
    %v1328 = vpop.f32.mrb[0].mxu0
    %1329 = vdwg.mxu0
    %1330 = vmatprep.subr.bf16.mxu0 %v167
    %1331 = vmatpush1.bf16.msra.mxu0 %v166
    %1332 = vmatprep.subr.bf16.mxu0 %v171
    %1333 = vmatpush1.bf16.msra.mxu0 %v170
    %1334 = vmatprep.subr.bf16.mxu0 %v175
    %1335 = vmatpush1.bf16.msra.mxu0 %v174
    %1336 = vmatprep.subr.bf16.mxu0 %v179
    %1337 = vmatpush1.bf16.msra.mxu0 %v178
    %1338 = vmatprep.subr.bf16.mxu0 %v183
    %1339 = vmatpush1.bf16.msra.mxu0 %v182
    %1340 = vmatprep.subr.bf16.mxu0 %v187
    %1341 = vmatpush1.bf16.msra.mxu0 %v186
    %1342 = vmatprep.subr.bf16.mxu0 %v191
    %1343 = vmatpush1.bf16.msra.mxu0 %v190
    %1344 = vmatprep.subr.bf16.mxu0 %v195
    %1345 = vmatpush1.bf16.msra.mxu0 %v194
    %1346 = vmatprep.subr.bf16.mxu0 0
    %1347 = vmatpush1.bf16.msra.mxu0 0
    %1348 = vmatprep.subr.bf16.mxu0 0
    %1349 = vmatpush1.bf16.msra.mxu0 0
    %1350 = vmatprep.subr.bf16.mxu0 0
    %1351 = vmatpush1.bf16.msra.mxu0 0
    %1352 = vmatprep.subr.bf16.mxu0 0
    %1353 = vmatpush1.bf16.msra.mxu0 0
    %1354 = vmatprep.subr.bf16.mxu0 0
    %1355 = vmatpush1.bf16.msra.mxu0 0
    %1356 = vmatprep.subr.bf16.mxu0 0
    %1357 = vmatpush1.bf16.msra.mxu0 0
    %1358 = vmatprep.subr.bf16.mxu0 0
    %1359 = vmatpush1.bf16.msra.mxu0 0
    %1360 = vmatprep.subr.bf16.mxu0 0
    %1361 = vmatpush1.bf16.msra.mxu0 0
    %1362 = vmatprep.mubr.bf16.mxu0 0
    %1363 = vmatmul.mubr.bf16.gmra.mrb[0].mxu0 %v1267
    %v1364 = vpop.f32.mrb[0].mxu0
    %v1365 = vadd.f32 %v1280, %v1364
    %v1366 = vpop.f32.mrb[0].mxu0
    %v1367 = vadd.f32 %v1284, %v1366
    %v1368 = vpop.f32.mrb[0].mxu0
    %v1369 = vpop.f32.mrb[0].mxu0
    %1370 = vdwg.mxu0
    %v1371 = vxor.u32 %v1324, 2147483648
    %v1372 = vxor.u32 %v1326, 2147483648
    %v1373 = vxor.u32 %v1365, 2147483648
    %v1374 = vmul.f32 %v1371, 1.442695
    %v1375 = vpow.pop %v1374
    %v1376 = vmul.f32 %v1372, 1.442695
    %v1377 = vpow.pop %v1376
    %v1378 = vmul.f32 %v1373, 1.442695
    %v1379 = vpow.pop %v1378
    %v1380 = vadd.f32 %v1375, 1.0
    %v1381 = vadd.f32 %v1377, 1.0
    %v1382 = vadd.f32 %v1379, 1.0
    %v1383 = vrcp.pop %v1380
    %v1384 = vmul.f32 1.0, %v1383
    %v1385 = vrcp.pop %v1381
    %v1386 = vmul.f32 1.0, %v1385
    %v1387 = vrcp.pop %v1382
    %v1388 = vmul.f32 1.0, %v1387
    %v1389 = vtanh.pop %v1367
    %v1390 = vmul.f32 %v1386, %v1262
    %v1391 = vmul.f32 %v1384, %v1389
    %v1392 = vadd.f32 %v1390, %v1391
    %v1393 = vtanh.pop %v1392
    %v1394 = vmul.f32 %v1388, %v1393
    %s1395 = scalar_lea.vmem %s0, 33
    %v1396 = vld [vmem:[%s1395] ss:$8 sm:$0xf]
    %v1397 = vpack.c.bf16 %v1394, %v1394
    %v1399 = vlaneseq
    %v1400 = vshrl.u32 %v1399, 7
    %v1401 = vsub.s32 0, %v1400
    %v1402 = vrot.slane %v1396, %v1401
    %v1403 = vlaneseq
    %v1404 = vshrl.u32 %v1403, 7
    %v1405 = vsub.s32 1, %v1404
    %v1406 = vrot.slane %v1396, %v1405
    %v1407 = vlaneseq
    %v1408 = vshrl.u32 %v1407, 7
    %v1409 = vsub.s32 2, %v1408
    %v1410 = vrot.slane %v1396, %v1409
    %v1411 = vlaneseq
    %v1412 = vshrl.u32 %v1411, 7
    %v1413 = vsub.s32 3, %v1412
    %v1414 = vrot.slane %v1396, %v1413
    %1419 = vmatprep.subr.bf16.mxu0 %v165
    %1420 = vmatpush1.bf16.msra.mxu0 %v164
    %1421 = vmatprep.subr.bf16.mxu0 %v169
    %1422 = vmatpush1.bf16.msra.mxu0 %v168
    %1423 = vmatprep.subr.bf16.mxu0 %v173
    %1424 = vmatpush1.bf16.msra.mxu0 %v172
    %1425 = vmatprep.subr.bf16.mxu0 %v177
    %1426 = vmatpush1.bf16.msra.mxu0 %v176
    %1427 = vmatprep.subr.bf16.mxu0 %v181
    %1428 = vmatpush1.bf16.msra.mxu0 %v180
    %1429 = vmatprep.subr.bf16.mxu0 %v185
    %1430 = vmatpush1.bf16.msra.mxu0 %v184
    %1431 = vmatprep.subr.bf16.mxu0 %v189
    %1432 = vmatpush1.bf16.msra.mxu0 %v188
    %1433 = vmatprep.subr.bf16.mxu0 %v193
    %1434 = vmatpush1.bf16.msra.mxu0 %v192
    %1435 = vmatprep.subr.bf16.mxu0 0
    %1436 = vmatpush1.bf16.msra.mxu0 0
    %1437 = vmatprep.subr.bf16.mxu0 0
    %1438 = vmatpush1.bf16.msra.mxu0 0
    %1439 = vmatprep.subr.bf16.mxu0 0
    %1440 = vmatpush1.bf16.msra.mxu0 0
    %1441 = vmatprep.subr.bf16.mxu0 0
    %1442 = vmatpush1.bf16.msra.mxu0 0
    %1443 = vmatprep.subr.bf16.mxu0 0
    %1444 = vmatpush1.bf16.msra.mxu0 0
    %1445 = vmatprep.subr.bf16.mxu0 0
    %1446 = vmatpush1.bf16.msra.mxu0 0
    %1447 = vmatprep.subr.bf16.mxu0 0
    %1448 = vmatpush1.bf16.msra.mxu0 0
    %1449 = vmatprep.subr.bf16.mxu0 0
    %1450 = vmatpush1.bf16.msra.mxu0 0
    %1451 = vmatprep.mubr.bf16.mxu0 0
    %1452 = vmatmul.mubr.bf16.gmra.mrb[0].mxu0 %v1397
    %v1453 = vpop.f32.mrb[0].mxu0
    %v1454 = vadd.f32 %v1402, %v1453
    %v1455 = vpop.f32.mrb[0].mxu0
    %v1456 = vadd.f32 %v1406, %v1455
    %v1457 = vpop.f32.mrb[0].mxu0
    %v1458 = vpop.f32.mrb[0].mxu0
    %1459 = vdwg.mxu0
    %1460 = vmatprep.subr.bf16.mxu0 %v167
    %1461 = vmatpush1.bf16.msra.mxu0 %v166
    %1462 = vmatprep.subr.bf16.mxu0 %v171
    %1463 = vmatpush1.bf16.msra.mxu0 %v170
    %1464 = vmatprep.subr.bf16.mxu0 %v175
    %1465 = vmatpush1.bf16.msra.mxu0 %v174
    %1466 = vmatprep.subr.bf16.mxu0 %v179
    %1467 = vmatpush1.bf16.msra.mxu0 %v178
    %1468 = vmatprep.subr.bf16.mxu0 %v183
    %1469 = vmatpush1.bf16.msra.mxu0 %v182
    %1470 = vmatprep.subr.bf16.mxu0 %v187
    %1471 = vmatpush1.bf16.msra.mxu0 %v186
    %1472 = vmatprep.subr.bf16.mxu0 %v191
    %1473 = vmatpush1.bf16.msra.mxu0 %v190
    %1474 = vmatprep.subr.bf16.mxu0 %v195
    %1475 = vmatpush1.bf16.msra.mxu0 %v194
    %1476 = vmatprep.subr.bf16.mxu0 0
    %1477 = vmatpush1.bf16.msra.mxu0 0
    %1478 = vmatprep.subr.bf16.mxu0 0
    %1479 = vmatpush1.bf16.msra.mxu0 0
    %1480 = vmatprep.subr.bf16.mxu0 0
    %1481 = vmatpush1.bf16.msra.mxu0 0
    %1482 = vmatprep.subr.bf16.mxu0 0
    %1483 = vmatpush1.bf16.msra.mxu0 0
    %1484 = vmatprep.subr.bf16.mxu0 0
    %1485 = vmatpush1.bf16.msra.mxu0 0
    %1486 = vmatprep.subr.bf16.mxu0 0
    %1487 = vmatpush1.bf16.msra.mxu0 0
    %1488 = vmatprep.subr.bf16.mxu0 0
    %1489 = vmatpush1.bf16.msra.mxu0 0
    %1490 = vmatprep.subr.bf16.mxu0 0
    %1491 = vmatpush1.bf16.msra.mxu0 0
    %1492 = vmatprep.mubr.bf16.mxu0 0
    %1493 = vmatmul.mubr.bf16.gmra.mrb[0].mxu0 %v1397
    %v1494 = vpop.f32.mrb[0].mxu0
    %v1495 = vadd.f32 %v1410, %v1494
    %v1496 = vpop.f32.mrb[0].mxu0
    %v1497 = vadd.f32 %v1414, %v1496
    %v1498 = vpop.f32.mrb[0].mxu0
    %v1499 = vpop.f32.mrb[0].mxu0
    %1500 = vdwg.mxu0
    %v1501 = vxor.u32 %v1454, 2147483648
    %v1502 = vxor.u32 %v1456, 2147483648
    %v1503 = vxor.u32 %v1495, 2147483648
    %v1504 = vmul.f32 %v1501, 1.442695
    %v1505 = vpow.pop %v1504
    %v1506 = vmul.f32 %v1502, 1.442695
    %v1507 = vpow.pop %v1506
    %v1508 = vmul.f32 %v1503, 1.442695
    %v1509 = vpow.pop %v1508
    %v1510 = vadd.f32 %v1505, 1.0
    %v1511 = vadd.f32 %v1507, 1.0
    %v1512 = vadd.f32 %v1509, 1.0
    %v1513 = vrcp.pop %v1510
    %v1514 = vmul.f32 1.0, %v1513
    %v1515 = vrcp.pop %v1511
    %v1516 = vmul.f32 1.0, %v1515
    %v1517 = vrcp.pop %v1512
    %v1518 = vmul.f32 1.0, %v1517
    %v1519 = vtanh.pop %v1497
    %v1520 = vmul.f32 %v1516, %v1392
    %v1521 = vmul.f32 %v1514, %v1519
    %v1522 = vadd.f32 %v1520, %v1521
    %v1523 = vtanh.pop %v1522
    %v1524 = vmul.f32 %v1518, %v1523
    %s1525 = scalar_lea.vmem %s0, 34
    %v1526 = vld [vmem:[%s1525] ss:$8 sm:$0xf]
    %v1527 = vpack.c.bf16 %v1524, %v1524
    %v1529 = vlaneseq
    %v1530 = vshrl.u32 %v1529, 7
    %v1531 = vsub.s32 0, %v1530
    %v1532 = vrot.slane %v1526, %v1531
    %v1533 = vlaneseq
    %v1534 = vshrl.u32 %v1533, 7
    %v1535 = vsub.s32 1, %v1534
    %v1536 = vrot.slane %v1526, %v1535
    %v1537 = vlaneseq
    %v1538 = vshrl.u32 %v1537, 7
    %v1539 = vsub.s32 2, %v1538
    %v1540 = vrot.slane %v1526, %v1539
    %v1541 = vlaneseq
    %v1542 = vshrl.u32 %v1541, 7
    %v1543 = vsub.s32 3, %v1542
    %v1544 = vrot.slane %v1526, %v1543
    %1549 = vmatprep.subr.bf16.mxu0 %v165
    %1550 = vmatpush1.bf16.msra.mxu0 %v164
    %1551 = vmatprep.subr.bf16.mxu0 %v169
    %1552 = vmatpush1.bf16.msra.mxu0 %v168
    %1553 = vmatprep.subr.bf16.mxu0 %v173
    %1554 = vmatpush1.bf16.msra.mxu0 %v172
    %1555 = vmatprep.subr.bf16.mxu0 %v177
    %1556 = vmatpush1.bf16.msra.mxu0 %v176
    %1557 = vmatprep.subr.bf16.mxu0 %v181
    %1558 = vmatpush1.bf16.msra.mxu0 %v180
    %1559 = vmatprep.subr.bf16.mxu0 %v185
    %1560 = vmatpush1.bf16.msra.mxu0 %v184
    %1561 = vmatprep.subr.bf16.mxu0 %v189
    %1562 = vmatpush1.bf16.msra.mxu0 %v188
    %1563 = vmatprep.subr.bf16.mxu0 %v193
    %1564 = vmatpush1.bf16.msra.mxu0 %v192
    %1565 = vmatprep.subr.bf16.mxu0 0
    %1566 = vmatpush1.bf16.msra.mxu0 0
    %1567 = vmatprep.subr.bf16.mxu0 0
    %1568 = vmatpush1.bf16.msra.mxu0 0
    %1569 = vmatprep.subr.bf16.mxu0 0
    %1570 = vmatpush1.bf16.msra.mxu0 0
    %1571 = vmatprep.subr.bf16.mxu0 0
    %1572 = vmatpush1.bf16.msra.mxu0 0
    %1573 = vmatprep.subr.bf16.mxu0 0
    %1574 = vmatpush1.bf16.msra.mxu0 0
    %1575 = vmatprep.subr.bf16.mxu0 0
    %1576 = vmatpush1.bf16.msra.mxu0 0
    %1577 = vmatprep.subr.bf16.mxu0 0
    %1578 = vmatpush1.bf16.msra.mxu0 0
    %1579 = vmatprep.subr.bf16.mxu0 0
    %1580 = vmatpush1.bf16.msra.mxu0 0
    %1581 = vmatprep.mubr.bf16.mxu0 0
    %1582 = vmatmul.mubr.bf16.gmra.mrb[0].mxu0 %v1527
    %v1583 = vpop.f32.mrb[0].mxu0
    %v1584 = vadd.f32 %v1532, %v1583
    %v1585 = vpop.f32.mrb[0].mxu0
    %v1586 = vadd.f32 %v1536, %v1585
    %v1587 = vpop.f32.mrb[0].mxu0
    %v1588 = vpop.f32.mrb[0].mxu0
    %1589 = vdwg.mxu0
    %1590 = vmatprep.subr.bf16.mxu0 %v167
    %1591 = vmatpush1.bf16.msra.mxu0 %v166
    %1592 = vmatprep.subr.bf16.mxu0 %v171
    %1593 = vmatpush1.bf16.msra.mxu0 %v170
    %1594 = vmatprep.subr.bf16.mxu0 %v175
    %1595 = vmatpush1.bf16.msra.mxu0 %v174
    %1596 = vmatprep.subr.bf16.mxu0 %v179
    %1597 = vmatpush1.bf16.msra.mxu0 %v178
    %1598 = vmatprep.subr.bf16.mxu0 %v183
    %1599 = vmatpush1.bf16.msra.mxu0 %v182
    %1600 = vmatprep.subr.bf16.mxu0 %v187
    %1601 = vmatpush1.bf16.msra.mxu0 %v186
    %1602 = vmatprep.subr.bf16.mxu0 %v191
    %1603 = vmatpush1.bf16.msra.mxu0 %v190
    %1604 = vmatprep.subr.bf16.mxu0 %v195
    %1605 = vmatpush1.bf16.msra.mxu0 %v194
    %1606 = vmatprep.subr.bf16.mxu0 0
    %1607 = vmatpush1.bf16.msra.mxu0 0
    %1608 = vmatprep.subr.bf16.mxu0 0
    %1609 = vmatpush1.bf16.msra.mxu0 0
    %1610 = vmatprep.subr.bf16.mxu0 0
    %1611 = vmatpush1.bf16.msra.mxu0 0
    %1612 = vmatprep.subr.bf16.mxu0 0
    %1613 = vmatpush1.bf16.msra.mxu0 0
    %1614 = vmatprep.subr.bf16.mxu0 0
    %1615 = vmatpush1.bf16.msra.mxu0 0
    %1616 = vmatprep.subr.bf16.mxu0 0
    %1617 = vmatpush1.bf16.msra.mxu0 0
    %1618 = vmatprep.subr.bf16.mxu0 0
    %1619 = vmatpush1.bf16.msra.mxu0 0
    %1620 = vmatprep.subr.bf16.mxu0 0
    %1621 = vmatpush1.bf16.msra.mxu0 0
    %1622 = vmatprep.mubr.bf16.mxu0 0
    %1623 = vmatmul.mubr.bf16.gmra.mrb[0].mxu0 %v1527
    %v1624 = vpop.f32.mrb[0].mxu0
    %v1625 = vadd.f32 %v1540, %v1624
    %v1626 = vpop.f32.mrb[0].mxu0
    %v1627 = vadd.f32 %v1544, %v1626
    %v1628 = vpop.f32.mrb[0].mxu0
    %v1629 = vpop.f32.mrb[0].mxu0
    %1630 = vdwg.mxu0
    %v1631 = vxor.u32 %v1584, 2147483648
    %v1632 = vxor.u32 %v1586, 2147483648
    %v1633 = vxor.u32 %v1625, 2147483648
    %v1634 = vmul.f32 %v1631, 1.442695
    %v1635 = vpow.pop %v1634
    %v1636 = vmul.f32 %v1632, 1.442695
    %v1637 = vpow.pop %v1636
    %v1638 = vmul.f32 %v1633, 1.442695
    %v1639 = vpow.pop %v1638
    %v1640 = vadd.f32 %v1635, 1.0
    %v1641 = vadd.f32 %v1637, 1.0
    %v1642 = vadd.f32 %v1639, 1.0
    %v1643 = vrcp.pop %v1640
    %v1644 = vmul.f32 1.0, %v1643
    %v1645 = vrcp.pop %v1641
    %v1646 = vmul.f32 1.0, %v1645
    %v1647 = vrcp.pop %v1642
    %v1648 = vmul.f32 1.0, %v1647
    %v1649 = vtanh.pop %v1627
    %v1650 = vmul.f32 %v1646, %v1522
    %v1651 = vmul.f32 %v1644, %v1649
    %v1652 = vadd.f32 %v1650, %v1651
    %v1653 = vtanh.pop %v1652
    %v1654 = vmul.f32 %v1648, %v1653
    %s1655 = scalar_lea.vmem %s0, 35
    %v1656 = vld [vmem:[%s1655] ss:$8 sm:$0xf]
    %v1657 = vpack.c.bf16 %v1654, %v1654
    %v1659 = vlaneseq
    %v1660 = vshrl.u32 %v1659, 7
    %v1661 = vsub.s32 0, %v1660
    %v1662 = vrot.slane %v1656, %v1661
    %v1663 = vlaneseq
    %v1664 = vshrl.u32 %v1663, 7
    %v1665 = vsub.s32 1, %v1664
    %v1666 = vrot.slane %v1656, %v1665
    %v1667 = vlaneseq
    %v1668 = vshrl.u32 %v1667, 7
    %v1669 = vsub.s32 2, %v1668
    %v1670 = vrot.slane %v1656, %v1669
    %v1671 = vlaneseq
    %v1672 = vshrl.u32 %v1671, 7
    %v1673 = vsub.s32 3, %v1672
    %v1674 = vrot.slane %v1656, %v1673
    %1679 = vmatprep.subr.bf16.mxu0 %v165
    %1680 = vmatpush1.bf16.msra.mxu0 %v164
    %1681 = vmatprep.subr.bf16.mxu0 %v169
    %1682 = vmatpush1.bf16.msra.mxu0 %v168
    %1683 = vmatprep.subr.bf16.mxu0 %v173
    %1684 = vmatpush1.bf16.msra.mxu0 %v172
    %1685 = vmatprep.subr.bf16.mxu0 %v177
    %1686 = vmatpush1.bf16.msra.mxu0 %v176
    %1687 = vmatprep.subr.bf16.mxu0 %v181
    %1688 = vmatpush1.bf16.msra.mxu0 %v180
    %1689 = vmatprep.subr.bf16.mxu0 %v185
    %1690 = vmatpush1.bf16.msra.mxu0 %v184
    %1691 = vmatprep.subr.bf16.mxu0 %v189
    %1692 = vmatpush1.bf16.msra.mxu0 %v188
    %1693 = vmatprep.subr.bf16.mxu0 %v193
    %1694 = vmatpush1.bf16.msra.mxu0 %v192
    %1695 = vmatprep.subr.bf16.mxu0 0
    %1696 = vmatpush1.bf16.msra.mxu0 0
    %1697 = vmatprep.subr.bf16.mxu0 0
    %1698 = vmatpush1.bf16.msra.mxu0 0
    %1699 = vmatprep.subr.bf16.mxu0 0
    %1700 = vmatpush1.bf16.msra.mxu0 0
    %1701 = vmatprep.subr.bf16.mxu0 0
    %1702 = vmatpush1.bf16.msra.mxu0 0
    %1703 = vmatprep.subr.bf16.mxu0 0
    %1704 = vmatpush1.bf16.msra.mxu0 0
    %1705 = vmatprep.subr.bf16.mxu0 0
    %1706 = vmatpush1.bf16.msra.mxu0 0
    %1707 = vmatprep.subr.bf16.mxu0 0
    %1708 = vmatpush1.bf16.msra.mxu0 0
    %1709 = vmatprep.subr.bf16.mxu0 0
    %1710 = vmatpush1.bf16.msra.mxu0 0
    %1711 = vmatprep.mubr.bf16.mxu0 0
    %1712 = vmatmul.mubr.bf16.gmra.mrb[0].mxu0 %v1657
    %v1713 = vpop.f32.mrb[0].mxu0
    %v1714 = vadd.f32 %v1662, %v1713
    %v1715 = vpop.f32.mrb[0].mxu0
    %v1716 = vadd.f32 %v1666, %v1715
    %v1717 = vpop.f32.mrb[0].mxu0
    %v1718 = vpop.f32.mrb[0].mxu0
    %1719 = vdwg.mxu0
    %1720 = vmatprep.subr.bf16.mxu0 %v167
    %1721 = vmatpush1.bf16.msra.mxu0 %v166
    %1722 = vmatprep.subr.bf16.mxu0 %v171
    %1723 = vmatpush1.bf16.msra.mxu0 %v170
    %1724 = vmatprep.subr.bf16.mxu0 %v175
    %1725 = vmatpush1.bf16.msra.mxu0 %v174
    %1726 = vmatprep.subr.bf16.mxu0 %v179
    %1727 = vmatpush1.bf16.msra.mxu0 %v178
    %1728 = vmatprep.subr.bf16.mxu0 %v183
    %1729 = vmatpush1.bf16.msra.mxu0 %v182
    %1730 = vmatprep.subr.bf16.mxu0 %v187
    %1731 = vmatpush1.bf16.msra.mxu0 %v186
    %1732 = vmatprep.subr.bf16.mxu0 %v191
    %1733 = vmatpush1.bf16.msra.mxu0 %v190
    %1734 = vmatprep.subr.bf16.mxu0 %v195
    %1735 = vmatpush1.bf16.msra.mxu0 %v194
    %1736 = vmatprep.subr.bf16.mxu0 0
    %1737 = vmatpush1.bf16.msra.mxu0 0
    %1738 = vmatprep.subr.bf16.mxu0 0
    %1739 = vmatpush1.bf16.msra.mxu0 0
    %1740 = vmatprep.subr.bf16.mxu0 0
    %1741 = vmatpush1.bf16.msra.mxu0 0
    %1742 = vmatprep.subr.bf16.mxu0 0
    %1743 = vmatpush1.bf16.msra.mxu0 0
    %1744 = vmatprep.subr.bf16.mxu0 0
    %1745 = vmatpush1.bf16.msra.mxu0 0
    %1746 = vmatprep.subr.bf16.mxu0 0
    %1747 = vmatpush1.bf16.msra.mxu0 0
    %1748 = vmatprep.subr.bf16.mxu0 0
    %1749 = vmatpush1.bf16.msra.mxu0 0
    %1750 = vmatprep.subr.bf16.mxu0 0
    %1751 = vmatpush1.bf16.msra.mxu0 0
    %1752 = vmatprep.mubr.bf16.mxu0 0
    %1753 = vmatmul.mubr.bf16.gmra.mrb[0].mxu0 %v1657
    %v1754 = vpop.f32.mrb[0].mxu0
    %v1755 = vadd.f32 %v1670, %v1754
    %v1756 = vpop.f32.mrb[0].mxu0
    %v1757 = vadd.f32 %v1674, %v1756
    %v1758 = vpop.f32.mrb[0].mxu0
    %v1759 = vpop.f32.mrb[0].mxu0
    %1760 = vdwg.mxu0
    %v1761 = vxor.u32 %v1714, 2147483648
    %v1762 = vxor.u32 %v1716, 2147483648
    %v1763 = vxor.u32 %v1755, 2147483648
    %v1764 = vmul.f32 %v1761, 1.442695
    %v1765 = vpow.pop %v1764
    %v1766 = vmul.f32 %v1762, 1.442695
    %v1767 = vpow.pop %v1766
    %v1768 = vmul.f32 %v1763, 1.442695
    %v1769 = vpow.pop %v1768
    %v1770 = vadd.f32 %v1765, 1.0
    %v1771 = vadd.f32 %v1767, 1.0
    %v1772 = vadd.f32 %v1769, 1.0
    %v1773 = vrcp.pop %v1770
    %v1774 = vmul.f32 1.0, %v1773
    %v1775 = vrcp.pop %v1771
    %v1776 = vmul.f32 1.0, %v1775
    %v1777 = vrcp.pop %v1772
    %v1778 = vmul.f32 1.0, %v1777
    %v1779 = vtanh.pop %v1757
    %v1780 = vmul.f32 %v1776, %v1652
    %v1781 = vmul.f32 %v1774, %v1779
    %v1782 = vadd.f32 %v1780, %v1781
    %v1783 = vtanh.pop %v1782
    %v1784 = vmul.f32 %v1778, %v1783
    %v1785 = vld [vmem:[%s2] sm:$0x1]
    %v1786 = vmul.f32 %v1784, %v1785
    %vm1787 = vcmask 1040384
    %v1788 = vsel %vm1787, %v1786, 0.0
    %1789 = vadd.xlane.f32.xlu0 %v1788
    %v1790 = vpop.xlane.xlu0 %1789
    %v1791 = vld [vmem:[#allocation2] sm:$0x1]
    %v1792 = vadd.f32 %v1790, %v1791
    %vm1793 = vcmask 0
    %1794 = vst.msk [vmem:[#allocation6] sm:$0x1] %vm1793, %v1792
    // Predicated region
    $region22: #{lstm_forward_packed.1} parent=1 // pred_check
      _
    $region23: #{lstm_forward_packed.1} parent=1 // pred_check_branch
      %1796 = sbr.rel (0) target = $region25
    $region24: #{lstm_forward_packed.1} parent=1 // pred_region
      %s1798 = ssub.s32 16, 16
      %1799 = vsyncadd [#allocation5], %s1798
      %s1801 = sshll.u32 [#allocation6], 4
      %s1802 = int_to_ptr.vmem [resolvable:$true] %s1801
      %1804 = dma.vmem_to_hbm [thread:$0]  %s1802, 16, %s4, [#allocation5]
    $region25: #{lstm_forward_packed.1} parent=1 // pred_fallthru
      _
    // Predicated region
    $region26: #{lstm_forward_packed.1} parent=1 // pred_check
      _
    $region27: #{lstm_forward_packed.1} parent=1 // pred_check_branch
      %1806 = sbr.rel (0) target = $region29
    $region28: #{lstm_forward_packed.1} parent=1 // pred_region
      %1807 = dma.done [#allocation5], 16
    $region29: #{lstm_forward_packed.1} parent=1 // pred_fallthru
      _
    %1808 = vsyncpa [#allocation4], 1
    %1809 = vsyncpa [#allocation5], 1

</llo_original>
